<compile_context>
chip_gen: v7x
topology: tpu7x:2x2x1
jax: 0.10.0
libtpu: 0.0.40
codegen_flags: <defaults>
</compile_context>

<pallas_src>
import jax
import jax.numpy as jnp
from jax.experimental import pallas as pl
from jax.experimental.pallas import tpu as pltpu

LANES = 128     # lane width == hidden width of the x-MLP
D64 = 64
ALIGN = 16      # bf16 sublane tile is (16, 128): keep slab sub-blocks tile-aligned
TILE_B = 128    # batch tile (rows per grid step)


# ----------------------------------------------------------------------------- layout
def _slab_layout(h_dim, data_dim):
    """Row offsets of each weight block inside the single packed bf16 slab."""
    rows = (("w1", h_dim), ("w2", LANES), ("w3", LANES),
            ("a1", data_dim), ("a2", LANES), ("px", LANES), ("pa", LANES))
    offs, off = {}, 0
    for name, r in rows:
        offs[name] = off
        off += -(-r // ALIGN) * ALIGN
    return offs, off


# ------------------------------------------------------------------------------ params
def init_params(key, h_dim, h_dim_v, data_dim):
    """PyTorch-default-style init: U(-1/sqrt(fan_in), 1/sqrt(fan_in)), f32 masters."""
    def linear(k, fi, fo):
        kw, kb = jax.random.split(k)
        bound = 1.0 / (fi ** 0.5)
        w = jax.random.uniform(kw, (fi, fo), jnp.float32, -bound, bound)
        b = jax.random.uniform(kb, (1, fo), jnp.float32, -bound, bound)
        return w, b

    ks = jax.random.split(key, 8)
    w1, b1 = linear(ks[0], h_dim, LANES)        # model[0]
    w2, b2 = linear(ks[1], LANES, LANES)        # model[2]
    w3, b3 = linear(ks[2], LANES, D64)          # model[4]
    t1, tb1 = linear(ks[3], 3, D64)             # t_nn[0]
    t2, tb2 = linear(ks[4], D64, D64)           # t_nn[2]
    a1, ab1 = linear(ks[5], data_dim, D64)      # a_nn[0]
    a2, ab2 = linear(ks[6], D64, D64)           # a_nn[2]
    pw, pb = linear(ks[7], 3 * D64, h_dim_v)    # proj
    return (w1, b1, w2, b2, w3, b3, t1, tb1, t2, tb2, a1, ab1, a2, ab2, pw, pb)


def pack_params(params):
    """Pack weights into one bf16 slab + one f32 bias slab (done ONCE, outside jit)."""
    (w1, b1, w2, b2, w3, b3, t1, tb1, t2, tb2, a1, ab1, a2, ab2, pw, pb) = params
    h_dim, data_dim = w1.shape[0], a1.shape[0]
    offs, total = _slab_layout(h_dim, data_dim)

    def rpad(r):
        return -(-r // ALIGN) * ALIGN

    def pad2(m, rows, cols=LANES):
        return jnp.pad(m, ((0, rows - m.shape[0]), (0, cols - m.shape[1])))

    w_slab = jnp.concatenate([
        pad2(w1, rpad(h_dim)),                 # x-MLP Linear(h, 128)
        pad2(w2, rpad(LANES)),                 # x-MLP Linear(128, 128)
        pad2(w3, rpad(LANES)),                 # x-MLP Linear(128, 64)  -> cols 64: zero
        pad2(a1, rpad(data_dim)),              # a_nn  Linear(d, 64)    -> cols 64: zero
        pad2(a2, rpad(LANES)),                 # a_nn  Linear(64, 64)   -> zero-padded
        pad2(pw[D64:2 * D64], rpad(LANES)),    # proj rows for out_x    -> zero-padded
        pad2(pw[2 * D64:], rpad(LANES)),       # proj rows for out_a    -> zero-padded
    ], axis=0).astype(jnp.bfloat16)
    assert w_slab.shape == (total, LANES)

    def brow(v):
        v = v.reshape(1, -1)
        return jnp.pad(v, ((0, 0), (0, LANES - v.shape[1])))

    bias_slab = jnp.concatenate(
        [brow(b1), brow(b2), brow(b3), brow(ab1), brow(ab2),
         jnp.zeros((3, LANES), jnp.float32)], axis=0)          # (8, 128) f32

    t_params = (t1, tb1, t2, tb2, pw[:D64], pb)                # tiny; used in wrapper
    return w_slab, bias_slab, t_params


# ------------------------------------------------------------------------------ kernel
def _make_kernel(h_dim, data_dim, offs):
    o_w1, o_w2, o_w3 = offs["w1"], offs["w2"], offs["w3"]
    o_a1, o_a2 = offs["a1"], offs["a2"]
    o_px, o_pa = offs["px"], offs["pa"]

    def kernel(x_ref, a_ref, w_ref, bias_ref, tbias_ref, out_ref):
        f32, bf16 = jnp.float32, jnp.bfloat16

        def dot(lhs, rhs):
            # bf16 x bf16 MXU operands, f32 accumulation.
            return jnp.dot(lhs, rhs, preferred_element_type=f32)

        b1 = bias_ref[0:1, :]
        b2 = bias_ref[1:2, :]
        b3 = bias_ref[2:3, :]
        ab1 = bias_ref[3:4, :]
        ab2 = bias_ref[4:5, :]

        # x branch: Linear(h,128) -> Tanh -> Linear(128,128) -> Tanh -> Linear(128,64)
        h = jnp.tanh(dot(x_ref[...], w_ref[o_w1:o_w1 + h_dim, :]) + b1)
        h = jnp.tanh(dot(h.astype(bf16), w_ref[o_w2:o_w2 + LANES, :]) + b2)
        out_x = dot(h.astype(bf16), w_ref[o_w3:o_w3 + LANES, :]) + b3     # (tb,128), cols 64: zero

        # a branch: Linear(d,64) -> Tanh -> Linear(64,64)   (zero-padded to 128 lanes)
        ha = jnp.tanh(dot(a_ref[...], w_ref[o_a1:o_a1 + data_dim, :]) + ab1)
        out_a = dot(ha.astype(bf16), w_ref[o_a2:o_a2 + LANES, :]) + ab2   # (tb,128), cols 64: zero

        # proj(cat([out_t, out_x, out_a])) = out_t@P_t + out_x@P_x + out_a@P_a + pb
        # out_t@P_t + pb is the precomputed (1,128) t_bias; P_x / P_a are zero-row-padded
        # so the padded cols of out_x / out_a never contribute.
        out_ref[...] = (dot(out_x.astype(bf16), w_ref[o_px:o_px + LANES, :])
                        + dot(out_a.astype(bf16), w_ref[o_pa:o_pa + LANES, :])
                        + tbias_ref[...])

    return kernel


# ----------------------------------------------------------------------------- wrapper
def make_sigma_v(h_dim, data_dim, h_dim_v, tile_b=TILE_B):
    offs, total_rows = _slab_layout(h_dim, data_dim)
    kernel = _make_kernel(h_dim, data_dim, offs)

    @jax.jit
    def forward(t, x, a, w_slab, bias_slab, t_params):
        t1, tb1, t2, tb2, pt, pb = t_params

        # t-branch hoisted out of the kernel: depends only on t, not on x / a.
        tf = jnp.concatenate([t, jnp.sin(t), jnp.cos(t)], axis=0).reshape(1, 3)
        out_t = jnp.tanh(tf @ t1 + tb1) @ t2 + tb2                 # (1, 64)
        t_bias = out_t @ pt + pb                                   # (1, h_dim_v)
        t_bias = jnp.pad(t_bias, ((0, 0), (0, LANES - h_dim_v)))   # lane-dense (1, 128)

        b = x.shape[0]
        b_pad = -(-b // tile_b) * tile_b
        xp = jnp.pad(x, ((0, b_pad - b), (0, 0))).astype(jnp.bfloat16)
        ap = jnp.pad(a, ((0, b_pad - b), (0, 0))).astype(jnp.bfloat16)

        out = pl.pallas_call(
            kernel,
            out_shape=jax.ShapeDtypeStruct((b_pad, LANES), jnp.float32),
            grid_spec=pltpu.PrefetchScalarGridSpec(
                num_scalar_prefetch=0,
                grid=(b_pad // tile_b,),
                in_specs=[
                    pl.BlockSpec((tile_b, h_dim), lambda i: (i, 0)),       # x tile
                    pl.BlockSpec((tile_b, data_dim), lambda i: (i, 0)),    # a tile
                    pl.BlockSpec((total_rows, LANES), lambda i: (0, 0)),   # weight slab (resident)
                    pl.BlockSpec((8, LANES), lambda i: (0, 0)),            # bias slab (resident)
                    pl.BlockSpec((1, LANES), lambda i: (0, 0)),            # t_bias (resident)
                ],
                out_specs=pl.BlockSpec((tile_b, LANES), lambda i: (i, 0)),
            ),
            compiler_params=pltpu.CompilerParams(
                dimension_semantics=("parallel",)),                        # v7x: 2 TCs split B
        )(xp, ap, w_slab, bias_slab, t_bias)
        return out[:b, :h_dim_v]

    return forward


# --------------------------------------------------------------------------- references
def sigma_v_reference(t, x, a, params):
    """Pure-JAX f32 reference (row-wise application of the PyTorch module)."""
    (w1, b1, w2, b2, w3, b3, t1, tb1, t2, tb2, a1, ab1, a2, ab2, pw, pb) = params
    out_x = jnp.tanh(x @ w1 + b1)
    out_x = jnp.tanh(out_x @ w2 + b2)
    out_x = out_x @ w3 + b3
    tf = jnp.concatenate([t, jnp.sin(t), jnp.cos(t)], axis=0).reshape(1, -1)
    out_t = jnp.tanh(tf @ t1 + tb1) @ t2 + tb2
    out_a = jnp.tanh(a @ a1 + ab1) @ a2 + ab2
    out = jnp.concatenate(
        [jnp.broadcast_to(out_t, (x.shape[0], D64)), out_x, out_a], axis=1)
    return out @ pw + pb


def sigma_v_reference_mixed(t, x, a, params):
    """Reference that mirrors the kernel's bf16-operand / f32-accumulate matmuls."""
    (w1, b1, w2, b2, w3, b3, t1, tb1, t2, tb2, a1, ab1, a2, ab2, pw, pb) = params
    bf16, f32 = jnp.bfloat16, jnp.float32

    def dot(lhs, rhs):
        return jnp.dot(lhs.astype(bf16), rhs.astype(bf16), preferred_element_type=f32)

    out_x = jnp.tanh(dot(x, w1) + b1)
    out_x = jnp.tanh(dot(out_x, w2) + b2)
    out_x = dot(out_x, w3) + b3
    out_a = jnp.tanh(dot(a, a1) + ab1)
    out_a = dot(out_a, a2) + ab2
    tf = jnp.concatenate([t, jnp.sin(t), jnp.cos(t)], axis=0).reshape(1, -1)
    out_t = jnp.tanh(tf @ t1 + tb1) @ t2 + tb2
    t_bias = out_t @ pw[:D64] + pb
    return dot(out_x, pw[D64:2 * D64]) + dot(out_a, pw[2 * D64:]) + t_bias


# --------------------------------------------------------------------------------- main
if __name__ == "__main__":
    H_DIM, H_DIM_V, DATA_DIM, B = 32, 32, 16, 256

    key = jax.random.PRNGKey(0)
    k_p, k_x, k_a, k_t = jax.random.split(key, 4)

    params = init_params(k_p, H_DIM, H_DIM_V, DATA_DIM)
    w_slab, bias_slab, t_params = pack_params(params)

    x = jax.random.normal(k_x, (B, H_DIM), jnp.float32)      # batch of hidden states
    a = jax.random.normal(k_a, (B, DATA_DIM), jnp.float32)   # batch of data inputs
    t = jax.random.uniform(k_t, (1,), jnp.float32)           # shared scalar time

    forward = make_sigma_v(H_DIM, DATA_DIM, H_DIM_V)
    out = jax.block_until_ready(forward(t, x, a, w_slab, bias_slab, t_params))
    assert out.shape == (B, H_DIM_V), out.shape

    # Tight check against a reference using the same bf16 matmul operands.
    ref_mixed = sigma_v_reference_mixed(t, x, a, params)
    assert jnp.allclose(out, ref_mixed, atol=1e-3, rtol=1e-3)

    # Loose check against the full-f32 module semantics (bf16 MXU operands).
    ref_f32 = sigma_v_reference(t, x, a, params)
    assert jnp.allclose(out, ref_f32, atol=5e-2, rtol=5e-2)

    print("KERNEL_OK")
</pallas_src>

<mosaic_0001>
module attributes {stable_mosaic.version = 11 : i64} {
  func.func @kernel(%arg0: i32, %arg1: memref<128x32xbf16, #tpu.memory_space<vmem>>, %arg2: memref<128x16xbf16, #tpu.memory_space<vmem>>, %arg3: memref<688x128xbf16, #tpu.memory_space<vmem>>, %arg4: memref<8x128xf32, #tpu.memory_space<vmem>>, %arg5: memref<1x128xf32, #tpu.memory_space<vmem>>, %arg6: memref<128x128xf32, #tpu.memory_space<vmem>>) attributes {dimension_semantics = [#tpu.dimension_semantics<parallel>], iteration_bounds = array<i64: 2>, scalar_prefetch = 0 : i64, scratch_operands = 0 : i64, tpu.core_type = #tpu.core_type<tc>, window_params = [{transform_indices = @transform_0, window_bounds = array<i64: 128, 32>}, {transform_indices = @transform_1, window_bounds = array<i64: 128, 16>}, {pipeline_mode = #tpu.pipeline_mode<synchronous>, transform_indices = @transform_2, window_bounds = array<i64: 688, 128>}, {pipeline_mode = #tpu.pipeline_mode<synchronous>, transform_indices = @transform_3, window_bounds = array<i64: 8, 128>}, {pipeline_mode = #tpu.pipeline_mode<synchronous>, transform_indices = @transform_4, window_bounds = array<i64: 1, 128>}, {transform_indices = @transform_5, window_bounds = array<i64: 128, 128>}]} {
    %c0 = arith.constant 0 : index
    %c0_0 = arith.constant 0 : index
    %0 = vector.load %arg4[%c0, %c0_0] : memref<8x128xf32, #tpu.memory_space<vmem>>, vector<1x128xf32>
    %c1 = arith.constant 1 : index
    %c0_1 = arith.constant 0 : index
    %1 = vector.load %arg4[%c1, %c0_1] : memref<8x128xf32, #tpu.memory_space<vmem>>, vector<1x128xf32>
    %c2 = arith.constant 2 : index
    %c0_2 = arith.constant 0 : index
    %2 = vector.load %arg4[%c2, %c0_2] : memref<8x128xf32, #tpu.memory_space<vmem>>, vector<1x128xf32>
    %c3 = arith.constant 3 : index
    %c0_3 = arith.constant 0 : index
    %3 = vector.load %arg4[%c3, %c0_3] : memref<8x128xf32, #tpu.memory_space<vmem>>, vector<1x128xf32>
    %c4 = arith.constant 4 : index
    %c0_4 = arith.constant 0 : index
    %4 = vector.load %arg4[%c4, %c0_4] : memref<8x128xf32, #tpu.memory_space<vmem>>, vector<1x128xf32>
    %c0_5 = arith.constant 0 : index
    %c0_6 = arith.constant 0 : index
    %5 = vector.load %arg1[%c0_5, %c0_6] : memref<128x32xbf16, #tpu.memory_space<vmem>>, vector<128x32xbf16>
    %c0_7 = arith.constant 0 : index
    %c0_8 = arith.constant 0 : index
    %6 = vector.load %arg3[%c0_7, %c0_8] : memref<688x128xbf16, #tpu.memory_space<vmem>>, vector<32x128xbf16>
    %cst = arith.constant dense<0.000000e+00> : vector<128x128xf32>
    %7 = tpu.matmul %5, %6, %cst {dimension_numbers = #tpu.dot_dimension_numbers<[1], [0], [0], [1], [0, 0, 1, 1], [], []>} : vector<128x32xbf16>, vector<32x128xbf16>, vector<128x128xf32> -> vector<128x128xf32>
    %8 = vector.broadcast %0 : vector<1x128xf32> to vector<128x128xf32>
    %9 = arith.addf %7, %8 : vector<128x128xf32>
    %10 = math.tanh %9 : vector<128x128xf32>
    %11 = arith.truncf %10 : vector<128x128xf32> to vector<128x128xbf16>
    %c32 = arith.constant 32 : index
    %c0_9 = arith.constant 0 : index
    %12 = vector.load %arg3[%c32, %c0_9] : memref<688x128xbf16, #tpu.memory_space<vmem>>, vector<128x128xbf16>
    %cst_10 = arith.constant dense<0.000000e+00> : vector<128x128xf32>
    %13 = tpu.matmul %11, %12, %cst_10 {dimension_numbers = #tpu.dot_dimension_numbers<[1], [0], [0], [1], [0, 0, 1, 1], [], []>} : vector<128x128xbf16>, vector<128x128xbf16>, vector<128x128xf32> -> vector<128x128xf32>
    %14 = vector.broadcast %1 : vector<1x128xf32> to vector<128x128xf32>
    %15 = arith.addf %13, %14 : vector<128x128xf32>
    %16 = math.tanh %15 : vector<128x128xf32>
    %17 = arith.truncf %16 : vector<128x128xf32> to vector<128x128xbf16>
    %c160 = arith.constant 160 : index
    %c0_11 = arith.constant 0 : index
    %18 = vector.load %arg3[%c160, %c0_11] : memref<688x128xbf16, #tpu.memory_space<vmem>>, vector<128x128xbf16>
    %cst_12 = arith.constant dense<0.000000e+00> : vector<128x128xf32>
    %19 = tpu.matmul %17, %18, %cst_12 {dimension_numbers = #tpu.dot_dimension_numbers<[1], [0], [0], [1], [0, 0, 1, 1], [], []>} : vector<128x128xbf16>, vector<128x128xbf16>, vector<128x128xf32> -> vector<128x128xf32>
    %20 = vector.broadcast %2 : vector<1x128xf32> to vector<128x128xf32>
    %21 = arith.addf %19, %20 : vector<128x128xf32>
    %c0_13 = arith.constant 0 : index
    %c0_14 = arith.constant 0 : index
    %22 = vector.load %arg2[%c0_13, %c0_14] : memref<128x16xbf16, #tpu.memory_space<vmem>>, vector<128x16xbf16>
    %c288 = arith.constant 288 : index
    %c0_15 = arith.constant 0 : index
    %23 = vector.load %arg3[%c288, %c0_15] : memref<688x128xbf16, #tpu.memory_space<vmem>>, vector<16x128xbf16>
    %cst_16 = arith.constant dense<0.000000e+00> : vector<128x128xf32>
    %24 = tpu.matmul %22, %23, %cst_16 {dimension_numbers = #tpu.dot_dimension_numbers<[1], [0], [0], [1], [0, 0, 1, 1], [], []>} : vector<128x16xbf16>, vector<16x128xbf16>, vector<128x128xf32> -> vector<128x128xf32>
    %25 = vector.broadcast %3 : vector<1x128xf32> to vector<128x128xf32>
    %26 = arith.addf %24, %25 : vector<128x128xf32>
    %27 = math.tanh %26 : vector<128x128xf32>
    %28 = arith.truncf %27 : vector<128x128xf32> to vector<128x128xbf16>
    %c304 = arith.constant 304 : index
    %c0_17 = arith.constant 0 : index
    %29 = vector.load %arg3[%c304, %c0_17] : memref<688x128xbf16, #tpu.memory_space<vmem>>, vector<128x128xbf16>
    %cst_18 = arith.constant dense<0.000000e+00> : vector<128x128xf32>
    %30 = tpu.matmul %28, %29, %cst_18 {dimension_numbers = #tpu.dot_dimension_numbers<[1], [0], [0], [1], [0, 0, 1, 1], [], []>} : vector<128x128xbf16>, vector<128x128xbf16>, vector<128x128xf32> -> vector<128x128xf32>
    %31 = vector.broadcast %4 : vector<1x128xf32> to vector<128x128xf32>
    %32 = arith.addf %30, %31 : vector<128x128xf32>
    %33 = arith.truncf %21 : vector<128x128xf32> to vector<128x128xbf16>
    %c432 = arith.constant 432 : index
    %c0_19 = arith.constant 0 : index
    %34 = vector.load %arg3[%c432, %c0_19] : memref<688x128xbf16, #tpu.memory_space<vmem>>, vector<128x128xbf16>
    %cst_20 = arith.constant dense<0.000000e+00> : vector<128x128xf32>
    %35 = tpu.matmul %33, %34, %cst_20 {dimension_numbers = #tpu.dot_dimension_numbers<[1], [0], [0], [1], [0, 0, 1, 1], [], []>} : vector<128x128xbf16>, vector<128x128xbf16>, vector<128x128xf32> -> vector<128x128xf32>
    %36 = arith.truncf %32 : vector<128x128xf32> to vector<128x128xbf16>
    %c560 = arith.constant 560 : index
    %c0_21 = arith.constant 0 : index
    %37 = vector.load %arg3[%c560, %c0_21] : memref<688x128xbf16, #tpu.memory_space<vmem>>, vector<128x128xbf16>
    %cst_22 = arith.constant dense<0.000000e+00> : vector<128x128xf32>
    %38 = tpu.matmul %36, %37, %cst_22 {dimension_numbers = #tpu.dot_dimension_numbers<[1], [0], [0], [1], [0, 0, 1, 1], [], []>} : vector<128x128xbf16>, vector<128x128xbf16>, vector<128x128xf32> -> vector<128x128xf32>
    %39 = arith.addf %35, %38 : vector<128x128xf32>
    %c0_23 = arith.constant 0 : index
    %c0_24 = arith.constant 0 : index
    %40 = vector.load %arg5[%c0_23, %c0_24] : memref<1x128xf32, #tpu.memory_space<vmem>>, vector<1x128xf32>
    %41 = vector.broadcast %40 : vector<1x128xf32> to vector<128x128xf32>
    %42 = arith.addf %39, %41 : vector<128x128xf32>
    %c0_25 = arith.constant 0 : index
    %c0_26 = arith.constant 0 : index
    %43 = vector.load %arg6[%c0_25, %c0_26] : memref<128x128xf32, #tpu.memory_space<vmem>>, vector<128x128xf32>
    tpu.vector_store %arg6[%c0_25, %c0_26], %42 {strides = array<i32>} : memref<128x128xf32, #tpu.memory_space<vmem>>, vector<128x128xf32>,
    return
  }
  func.func @transform_0(%arg0: i32) -> (i32, i32) {
    %c0_i32 = arith.constant 0 : i32
    %c0_i32_0 = arith.constant 0 : i32
    return %arg0, %c0_i32 : i32, i32
  }
  func.func @transform_1(%arg0: i32) -> (i32, i32) {
    %c0_i32 = arith.constant 0 : i32
    %c0_i32_0 = arith.constant 0 : i32
    return %arg0, %c0_i32 : i32, i32
  }
  func.func @transform_2(%arg0: i32) -> (i32, i32) {
    %c0_i32 = arith.constant 0 : i32
    %c0_i32_0 = arith.constant 0 : i32
    %c0_i32_1 = arith.constant 0 : i32
    return %c0_i32, %c0_i32_0 : i32, i32
  }
  func.func @transform_3(%arg0: i32) -> (i32, i32) {
    %c0_i32 = arith.constant 0 : i32
    %c0_i32_0 = arith.constant 0 : i32
    %c0_i32_1 = arith.constant 0 : i32
    return %c0_i32, %c0_i32_0 : i32, i32
  }
  func.func @transform_4(%arg0: i32) -> (i32, i32) {
    %c0_i32 = arith.constant 0 : i32
    %c0_i32_0 = arith.constant 0 : i32
    %c0_i32_1 = arith.constant 0 : i32
    return %c0_i32, %c0_i32_0 : i32, i32
  }
  func.func @transform_5(%arg0: i32) -> (i32, i32) {
    %c0_i32 = arith.constant 0 : i32
    %c0_i32_0 = arith.constant 0 : i32
    return %arg0, %c0_i32 : i32, i32
  }
}

</mosaic_0001>

<llo_original>
// kernel: forward.1
$region0: #{forward.1}
  #allocation0 [shape = 'u32[]', space=smem, size = 0x4, offset = 0x4, fixed_abs, tag = 'smem constant byte address 0x4 - core index']
  #allocation1 [shape = 'u32[144,128]{1,0:T(1,128)}', space=vmem, size = 0x12000, scoped, tag = 'internal scratch']
  %s0 = inlined_call_operand.vmem [shape: bf16[256,32], index: 0, kind: input, shape index: {}]
  %s1 = inlined_call_operand.vmem [shape: bf16[256,16], index: 1, kind: input, shape index: {}]
  %s2 = inlined_call_operand.vmem [shape: bf16[688,128], index: 2, kind: input, shape index: {}]
  %s3 = inlined_call_operand.vmem [shape: f32[8,128], index: 3, kind: input, shape index: {}]
  %s4 = inlined_call_operand.vmem [shape: f32[1,128], index: 4, kind: input, shape index: {}]
  %s5 = inlined_call_operand.vmem [shape: f32[256,128], index: 5, kind: output, shape index: {}]
  %s6 = sld [smem:[#allocation0]]
  $region53: #{forward.1} parent=0
    _
  %s8 = ssub.s32 1, %s6
  %s9 = scalar_select 0, %s8, %s6
  loop: start=0, step=1, limit=4
  $region2: #{forward.1} parent=0 // loop_pre_header
    _
  $region3: #{forward.1} parent=0 // loop_header
    %s11 = sphi 0, %s15
    %p12 = scmp.ge.s32.totalorder %s11, 4
    %s21 = sphi 0, %s23
    %s24 = sphi 0, %s21
    %s25 = sphi 0, %s24
    %s41 = sphi 0, %s25
    %s47 = sphi 0, %s49
    %s50 = sphi 0, %s47
    %s51 = sphi 0, %s50
    %s67 = sphi 0, %s51
    %s71 = sphi 0, %s71
    %s73 = sphi 0, %s71
    %s74 = sphi 0, %s73
    %s88 = sphi 0, %s74
    %s92 = sphi 0, %s92
    %s94 = sphi 0, %s92
    %s95 = sphi 0, %s94
    %s109 = sphi 0, %s95
    %s113 = sphi 0, %s113
    %s115 = sphi 0, %s113
    %s116 = sphi 0, %s115
    %s130 = sphi 0, %s116
    %s136 = sphi 0, %s138
    %s139 = sphi 0, %s136
    %s140 = sphi 0, %s139
    %s156 = sphi 0, %s140
  $region4: #{forward.1} parent=0 // loop_header_branch
    %14 = sbr.rel (%p12) target = $region8
  $region5: #{forward.1} parent=0 // loop_body
    %s16 = ssub.s32 %s11, 1
    %s17 = ssub.s32 %s11, 2
    %s18 = sadd.s32 %s11, 1
    %s19 = ssub.s32 %s11, %s18
    %p20 = scmp.eq.s32.totalorder %s19, 0
    %s22 = sadd.s32 %s21, 1
    %s23 = scalar_select %p20, %s21, %s22
    %p26 = pneg %p20
    %p27 = scmp.eq.s32.totalorder %s11, 1
    %p28 = por %p26, %p27
    %p29 = scmp.ne.s32.totalorder %s21, %s24
    %p30 = scmp.eq.s32.totalorder %s11, 0
    %p31 = por %p29, %p30
    %p32 = scmp.ne.s32.totalorder %s21, %s24
    %p33 = scmp.eq.s32.totalorder %s16, 1
    %p34 = por %p32, %p33
    %p35 = scmp.ne.s32.totalorder %s24, %s25
    %p36 = scmp.eq.s32.totalorder %s16, 0
    %p37 = por %p35, %p36
    %p38 = scmp.ne.s32.totalorder %s24, %s25
    %p39 = scmp.eq.s32.totalorder %s17, 1
    %p40 = por %p38, %p39
    %p42 = scmp.ne.s32.totalorder %s25, %s41
    %p43 = scmp.eq.s32.totalorder %s17, 0
    %p44 = por %p42, %p43
    %s45 = ssub.s32 %s11, %s18
    %p46 = scmp.eq.s32.totalorder %s45, 0
    %s48 = sadd.s32 %s47, 1
    %s49 = scalar_select %p46, %s47, %s48
    %p52 = pneg %p46
    %p53 = scmp.eq.s32.totalorder %s11, 1
    %p54 = por %p52, %p53
    %p55 = scmp.ne.s32.totalorder %s47, %s50
    %p56 = scmp.eq.s32.totalorder %s11, 0
    %p57 = por %p55, %p56
    %p58 = scmp.ne.s32.totalorder %s47, %s50
    %p59 = scmp.eq.s32.totalorder %s16, 1
    %p60 = por %p58, %p59
    %p61 = scmp.ne.s32.totalorder %s50, %s51
    %p62 = scmp.eq.s32.totalorder %s16, 0
    %p63 = por %p61, %p62
    %p64 = scmp.ne.s32.totalorder %s50, %s51
    %p65 = scmp.eq.s32.totalorder %s17, 1
    %p66 = por %p64, %p65
    %p68 = scmp.ne.s32.totalorder %s51, %s67
    %p69 = scmp.eq.s32.totalorder %s17, 0
    %p70 = por %p68, %p69
    %s72 = sadd.s32 %s71, 1
    %p75 = scmp.eq.s32.totalorder %s11, 1
    %p76 = scmp.ne.s32.totalorder %s71, %s73
    %p77 = scmp.eq.s32.totalorder %s11, 0
    %p78 = por %p76, %p77
    %p79 = scmp.ne.s32.totalorder %s71, %s73
    %p80 = scmp.eq.s32.totalorder %s16, 1
    %p81 = por %p79, %p80
    %p82 = scmp.ne.s32.totalorder %s73, %s74
    %p83 = scmp.eq.s32.totalorder %s16, 0
    %p84 = por %p82, %p83
    %p85 = scmp.ne.s32.totalorder %s73, %s74
    %p86 = scmp.eq.s32.totalorder %s17, 1
    %p87 = por %p85, %p86
    %p89 = scmp.ne.s32.totalorder %s74, %s88
    %p90 = scmp.eq.s32.totalorder %s17, 0
    %p91 = por %p89, %p90
    %s93 = sadd.s32 %s92, 1
    %p96 = scmp.eq.s32.totalorder %s11, 1
    %p97 = scmp.ne.s32.totalorder %s92, %s94
    %p98 = scmp.eq.s32.totalorder %s11, 0
    %p99 = por %p97, %p98
    %p100 = scmp.ne.s32.totalorder %s92, %s94
    %p101 = scmp.eq.s32.totalorder %s16, 1
    %p102 = por %p100, %p101
    %p103 = scmp.ne.s32.totalorder %s94, %s95
    %p104 = scmp.eq.s32.totalorder %s16, 0
    %p105 = por %p103, %p104
    %p106 = scmp.ne.s32.totalorder %s94, %s95
    %p107 = scmp.eq.s32.totalorder %s17, 1
    %p108 = por %p106, %p107
    %p110 = scmp.ne.s32.totalorder %s95, %s109
    %p111 = scmp.eq.s32.totalorder %s17, 0
    %p112 = por %p110, %p111
    %s114 = sadd.s32 %s113, 1
    %p117 = scmp.eq.s32.totalorder %s11, 1
    %p118 = scmp.ne.s32.totalorder %s113, %s115
    %p119 = scmp.eq.s32.totalorder %s11, 0
    %p120 = por %p118, %p119
    %p121 = scmp.ne.s32.totalorder %s113, %s115
    %p122 = scmp.eq.s32.totalorder %s16, 1
    %p123 = por %p121, %p122
    %p124 = scmp.ne.s32.totalorder %s115, %s116
    %p125 = scmp.eq.s32.totalorder %s16, 0
    %p126 = por %p124, %p125
    %p127 = scmp.ne.s32.totalorder %s115, %s116
    %p128 = scmp.eq.s32.totalorder %s17, 1
    %p129 = por %p127, %p128
    %p131 = scmp.ne.s32.totalorder %s116, %s130
    %p132 = scmp.eq.s32.totalorder %s17, 0
    %p133 = por %p131, %p132
    %s134 = ssub.s32 %s11, %s18
    %p135 = scmp.eq.s32.totalorder %s134, 0
    %s137 = sadd.s32 %s136, 1
    %s138 = scalar_select %p135, %s136, %s137
    %p141 = pneg %p135
    %p142 = scmp.eq.s32.totalorder %s11, 1
    %p143 = por %p141, %p142
    %p144 = scmp.ne.s32.totalorder %s136, %s139
    %p145 = scmp.eq.s32.totalorder %s11, 0
    %p146 = por %p144, %p145
    %p147 = scmp.ne.s32.totalorder %s136, %s139
    %p148 = scmp.eq.s32.totalorder %s16, 1
    %p149 = por %p147, %p148
    %p150 = scmp.ne.s32.totalorder %s139, %s140
    %p151 = scmp.eq.s32.totalorder %s16, 0
    %p152 = por %p150, %p151
    %p153 = scmp.ne.s32.totalorder %s139, %s140
    %p154 = scmp.eq.s32.totalorder %s17, 1
    %p155 = por %p153, %p154
    %p157 = scmp.ne.s32.totalorder %s140, %s156
    %p158 = scmp.eq.s32.totalorder %s17, 0
    %p159 = por %p157, %p158
    %p160 = scmp.le.s32.totalorder 1, %s11
    %p161 = scmp.lt.s32.totalorder %s11, 3
    %p162 = pnand %p160, %p161
    %p163 = pneg %p162
    // Predicated region
    $region9: #{forward.1} parent=5 // pred_check
      _
    $region10: #{forward.1} parent=5 // pred_check_branch
      %165 = sbr.rel (%p162) target = $region12
    $region11: #{forward.1} parent=5 // pred_region
      %s166 = ssub.s32 %s11, 1
      // Predicated region
      $region13: #{forward.1} parent=11 // pred_check
        %p167 = pneg %p84
      $region14: #{forward.1} parent=11 // pred_check_branch
        %169 = sbr.rel (%p167) target = $region16
      $region15: #{forward.1} parent=11 // pred_region
        _
      $region16: #{forward.1} parent=11 // pred_fallthru
        _
      // Predicated region
      $region17: #{forward.1} parent=11 // pred_check
        %p170 = pneg %p105
      $region18: #{forward.1} parent=11 // pred_check_branch
        %172 = sbr.rel (%p170) target = $region20
      $region19: #{forward.1} parent=11 // pred_region
        _
      $region20: #{forward.1} parent=11 // pred_fallthru
        _
      // Predicated region
      $region21: #{forward.1} parent=11 // pred_check
        %p173 = pneg %p126
      $region22: #{forward.1} parent=11 // pred_check_branch
        %175 = sbr.rel (%p173) target = $region24
      $region23: #{forward.1} parent=11 // pred_region
        _
      $region24: #{forward.1} parent=11 // pred_fallthru
        _
    $region12: #{forward.1} parent=5 // pred_fallthru
      _
    %p176 = scmp.lt.s32.totalorder %s11, 2
    // Predicated region
    $region25: #{forward.1} parent=5 // pred_check
      %p177 = pneg %p176
    $region26: #{forward.1} parent=5 // pred_check_branch
      %179 = sbr.rel (%p177) target = $region28
    $region27: #{forward.1} parent=5 // pred_region
      // Predicated region
      $region29: #{forward.1} parent=27 // pred_check
        %p180 = pneg %p31
      $region30: #{forward.1} parent=27 // pred_check_branch
        %182 = sbr.rel (%p180) target = $region32
      $region31: #{forward.1} parent=27 // pred_region
        %s183 = smul.u32 16, %s11
        %p184 = scmp.lt.s32.totalorder %s183, 31
        %s185 = scalar_select %p184, %s183, 31
        %s186 = smul.addr %s185, 4
        %s187 = scalar_lea.vmem %s0, %s186
        %s188 = smul.u32 16, %s11
      $region32: #{forward.1} parent=27 // pred_fallthru
        _
      // Predicated region
      $region33: #{forward.1} parent=27 // pred_check
        %p189 = pneg %p57
      $region34: #{forward.1} parent=27 // pred_check_branch
        %191 = sbr.rel (%p189) target = $region36
      $region35: #{forward.1} parent=27 // pred_region
        %s192 = smul.u32 16, %s11
        %p193 = scmp.lt.s32.totalorder %s192, 31
        %s194 = scalar_select %p193, %s192, 31
        %s195 = smul.addr %s194, 4
        %s196 = scalar_lea.vmem %s1, %s195
        %s197 = smul.u32 16, %s11
      $region36: #{forward.1} parent=27 // pred_fallthru
        _
    $region28: #{forward.1} parent=5 // pred_fallthru
      _
    %p198 = scmp.le.s32.totalorder 1, %s11
    %p199 = scmp.lt.s32.totalorder %s11, 3
    %p200 = pnand %p198, %p199
    %p201 = pneg %p200
    // Predicated region
    $region37: #{forward.1} parent=5 // pred_check
      _
    $region38: #{forward.1} parent=5 // pred_check_branch
      %203 = sbr.rel (%p200) target = $region40
    $region39: #{forward.1} parent=5 // pred_region
      %s204 = ssub.s32 %s11, 1
      %s205 = smul.u32 16, %s16
      %p206 = scmp.lt.s32.totalorder %s205, 31
      %s207 = scalar_select %p206, %s205, 31
      %s208 = smul.addr %s207, 4
      %s209 = scalar_lea.vmem %s0, %s208
      %p210 = pneg %p37
      %p211 = pneg %p34
      %s212 = smul.u32 16, %s16
      %p213 = scmp.lt.s32.totalorder %s212, 31
      %s214 = scalar_select %p213, %s212, 31
      %s215 = smul.addr %s214, 4
      %s216 = scalar_lea.vmem %s1, %s215
      %p217 = pneg %p63
      %p218 = pneg %p60
      %p219 = pneg %p84
      %p220 = pneg %p81
      %p221 = pneg %p105
      %p222 = pneg %p102
      %p223 = pneg %p126
      %p224 = pneg %p123
      %p225 = pneg %p152
      %p226 = pneg %p149
      %s227 = smul.u32 16, %s16
      %p228 = scmp.lt.s32.totalorder %s227, 31
      %s229 = scalar_select %p228, %s227, 31
      %s230 = smul.addr %s229, 8
      %s231 = scalar_lea.vmem %s5, %s230
      %s232 = smul.u32 16, %s16
      %p233 = scmp.lt.s32.totalorder %s232, 31
      %s234 = scalar_select %p233, %s232, 31
      %s235 = smul.addr %s234, 4
      %s236 = scalar_lea.vmem %s0, %s235
      %s237 = smul.u32 16, %s16
      %s238 = smul.u32 16, %s16
      %p239 = scmp.lt.s32.totalorder %s238, 31
      %s240 = scalar_select %p239, %s238, 31
      %s241 = smul.addr %s240, 4
      %s242 = scalar_lea.vmem %s1, %s241
      %s243 = smul.u32 16, %s16
      %s244 = smul.u32 16, %s16
      %p245 = scmp.lt.s32.totalorder %s244, 31
      %s246 = scalar_select %p245, %s244, 31
      %s247 = smul.addr %s246, 8
      %s248 = scalar_lea.vmem %s5, %s247
      %s249 = smul.u32 16, %s16
      %v251 = vld [vmem:[%s3] sm:$0x1]
      %v252 = vld [vmem:[%s3 + $0x1] sm:$0x1]
      %v253 = vld [vmem:[%s3 + $0x2] sm:$0x1]
      %v254 = vld [vmem:[%s3 + $0x3] sm:$0x1]
      %v255 = vld [vmem:[%s3 + $0x4] sm:$0x1]
      %v256 = vld [vmem:[%s236] sm:$0xf]
      %v257 = vld [vmem:[%s236 + $0x4] sm:$0xf]
      %v258 = vld [vmem:[%s236 + $0x8] sm:$0xf]
      %v259 = vld [vmem:[%s236 + $0xc] sm:$0xf]
      %v260 = vld [vmem:[%s236 + $0x10] sm:$0xf]
      %v261 = vld [vmem:[%s236 + $0x14] sm:$0xf]
      %v262 = vld [vmem:[%s236 + $0x18] sm:$0xf]
      %v263 = vld [vmem:[%s236 + $0x1c] sm:$0xf]
      %v264 = vld [vmem:[%s236 + $0x20] sm:$0xf]
      %v265 = vld [vmem:[%s236 + $0x24] sm:$0xf]
      %v266 = vld [vmem:[%s236 + $0x28] sm:$0xf]
      %v267 = vld [vmem:[%s236 + $0x2c] sm:$0xf]
      %v268 = vld [vmem:[%s236 + $0x30] sm:$0xf]
      %v269 = vld [vmem:[%s236 + $0x34] sm:$0xf]
      %v270 = vld [vmem:[%s236 + $0x38] sm:$0xf]
      %v271 = vld [vmem:[%s236 + $0x3c] sm:$0xf]
      %v272 = vld [vmem:[%s2] sm:$0xf]
      %v273 = vld [vmem:[%s2 + $0x4] sm:$0xf]
      %v274 = vld [vmem:[%s2 + $0x8] sm:$0xf]
      %v275 = vld [vmem:[%s2 + $0xc] sm:$0xf]
      %v276 = vlaneseq
      %v277 = vshrl.u32 %v276, 7
      %v278 = vsub.s32 0, %v277
      %v279 = vrot.slane %v251, %v278
      %v296 = vunpack.c.l.b16 %v256
      %v297 = vunpack.c.l.b16 %v257
      %v298 = vunpack.c.l.b16 %v258
      %v299 = vunpack.c.l.b16 %v259
      %v300 = vunpack.c.l.b16 %v260
      %v301 = vunpack.c.l.b16 %v261
      %v302 = vunpack.c.l.b16 %v262
      %v303 = vunpack.c.l.b16 %v263
      %v304 = vunpack.c.l.b16 %v264
      %v305 = vunpack.c.l.b16 %v265
      %v306 = vunpack.c.l.b16 %v266
      %v307 = vunpack.c.l.b16 %v267
      %v308 = vunpack.c.l.b16 %v268
      %v309 = vunpack.c.l.b16 %v269
      %v310 = vunpack.c.l.b16 %v270
      %v311 = vunpack.c.l.b16 %v271
      %v312 = vpack.c.b16 %v297, %v296
      %v313 = vpack.c.b16 %v299, %v298
      %v314 = vpack.c.b16 %v301, %v300
      %v315 = vpack.c.b16 %v303, %v302
      %v316 = vpack.c.b16 %v305, %v304
      %v317 = vpack.c.b16 %v307, %v306
      %v318 = vpack.c.b16 %v309, %v308
      %v319 = vpack.c.b16 %v311, %v310
      %v324 = vunpack.c.l.b16 %v272
      %v325 = vunpack.c.l.b16 %v273
      %v326 = vunpack.c.l.b16 %v274
      %v327 = vunpack.c.l.b16 %v275
      %v328 = vpack.c.b16 %v325, %v324
      %v329 = vpack.c.b16 %v327, %v326
      %vm332 = vcmask 261120
      %v334 = vsel %vm332, %v312, 0
      %v337 = vsel %vm332, %v313, 0
      %v340 = vsel %vm332, %v314, 0
      %v343 = vsel %vm332, %v315, 0
      %v346 = vsel %vm332, %v316, 0
      %v349 = vsel %vm332, %v317, 0
      %v352 = vsel %vm332, %v318, 0
      %v355 = vsel %vm332, %v319, 0
      %357 = vmatprep.subr.bf16.mxu0 0
      %358 = vmatpush1.bf16.msra.mxu0 %v328
      %359 = vmatprep.subr.bf16.mxu0 0
      %360 = vmatpush1.bf16.msra.mxu0 %v329
      %361 = vmatprep.subr.bf16.mxu0 0
      %362 = vmatpush1.bf16.msra.mxu0 0
      %363 = vmatprep.subr.bf16.mxu0 0
      %364 = vmatpush1.bf16.msra.mxu0 0
      %365 = vmatprep.subr.bf16.mxu0 0
      %366 = vmatpush1.bf16.msra.mxu0 0
      %367 = vmatprep.subr.bf16.mxu0 0
      %368 = vmatpush1.bf16.msra.mxu0 0
      %369 = vmatprep.subr.bf16.mxu0 0
      %370 = vmatpush1.bf16.msra.mxu0 0
      %371 = vmatprep.subr.bf16.mxu0 0
      %372 = vmatpush1.bf16.msra.mxu0 0
      %373 = vmatprep.subr.bf16.mxu0 0
      %374 = vmatpush1.bf16.msra.mxu0 0
      %375 = vmatprep.subr.bf16.mxu0 0
      %376 = vmatpush1.bf16.msra.mxu0 0
      %377 = vmatprep.subr.bf16.mxu0 0
      %378 = vmatpush1.bf16.msra.mxu0 0
      %379 = vmatprep.subr.bf16.mxu0 0
      %380 = vmatpush1.bf16.msra.mxu0 0
      %381 = vmatprep.subr.bf16.mxu0 0
      %382 = vmatpush1.bf16.msra.mxu0 0
      %383 = vmatprep.subr.bf16.mxu0 0
      %384 = vmatpush1.bf16.msra.mxu0 0
      %385 = vmatprep.subr.bf16.mxu0 0
      %386 = vmatpush1.bf16.msra.mxu0 0
      %387 = vmatprep.subr.bf16.mxu0 0
      %388 = vmatpush1.bf16.msra.mxu0 0
      %389 = vmatprep.mubr.bf16.mxu0 0
      %390 = vmatmul.mubr.bf16.gmra.mrb[0].mxu0 %v334
      %v391 = vpop.f32.mrb[0].mxu0
      %v392 = vadd.f32 %v279, %v391
      %v393 = vpop.f32.mrb[0].mxu0
      %v394 = vpop.f32.mrb[0].mxu0
      %v395 = vadd.f32 %v279, %v394
      %v396 = vpop.f32.mrb[0].mxu0
      %397 = vmatprep.mubr.bf16.mxu0 0
      %398 = vmatmul.mubr.bf16.gmra.mrb[0].mxu0 %v337
      %v399 = vpop.f32.mrb[0].mxu0
      %v400 = vadd.f32 %v279, %v399
      %v401 = vpop.f32.mrb[0].mxu0
      %v402 = vpop.f32.mrb[0].mxu0
      %v403 = vadd.f32 %v279, %v402
      %v404 = vpop.f32.mrb[0].mxu0
      %405 = vmatprep.mubr.bf16.mxu0 0
      %406 = vmatmul.mubr.bf16.gmra.mrb[0].mxu0 %v340
      %v407 = vpop.f32.mrb[0].mxu0
      %v408 = vadd.f32 %v279, %v407
      %v409 = vpop.f32.mrb[0].mxu0
      %v410 = vpop.f32.mrb[0].mxu0
      %v411 = vadd.f32 %v279, %v410
      %v412 = vpop.f32.mrb[0].mxu0
      %413 = vmatprep.mubr.bf16.mxu0 0
      %414 = vmatmul.mubr.bf16.gmra.mrb[0].mxu0 %v343
      %v415 = vpop.f32.mrb[0].mxu0
      %v416 = vadd.f32 %v279, %v415
      %v417 = vpop.f32.mrb[0].mxu0
      %v418 = vpop.f32.mrb[0].mxu0
      %v419 = vadd.f32 %v279, %v418
      %v420 = vpop.f32.mrb[0].mxu0
      %421 = vmatprep.mubr.bf16.mxu0 0
      %422 = vmatmul.mubr.bf16.gmra.mrb[0].mxu0 %v346
      %v423 = vpop.f32.mrb[0].mxu0
      %v424 = vadd.f32 %v279, %v423
      %v425 = vpop.f32.mrb[0].mxu0
      %v426 = vpop.f32.mrb[0].mxu0
      %v427 = vadd.f32 %v279, %v426
      %v428 = vpop.f32.mrb[0].mxu0
      %429 = vmatprep.mubr.bf16.mxu0 0
      %430 = vmatmul.mubr.bf16.gmra.mrb[0].mxu0 %v349
      %v431 = vpop.f32.mrb[0].mxu0
      %v432 = vadd.f32 %v279, %v431
      %v433 = vpop.f32.mrb[0].mxu0
      %v434 = vpop.f32.mrb[0].mxu0
      %v435 = vadd.f32 %v279, %v434
      %v436 = vpop.f32.mrb[0].mxu0
      %437 = vmatprep.mubr.bf16.mxu0 0
      %438 = vmatmul.mubr.bf16.gmra.mrb[0].mxu0 %v352
      %v439 = vpop.f32.mrb[0].mxu0
      %v440 = vadd.f32 %v279, %v439
      %v441 = vpop.f32.mrb[0].mxu0
      %v442 = vpop.f32.mrb[0].mxu0
      %v443 = vadd.f32 %v279, %v442
      %v444 = vpop.f32.mrb[0].mxu0
      %445 = vmatprep.mubr.bf16.mxu0 0
      %446 = vmatmul.mubr.bf16.gmra.mrb[0].mxu0 %v355
      %v447 = vpop.f32.mrb[0].mxu0
      %v448 = vadd.f32 %v279, %v447
      %v449 = vpop.f32.mrb[0].mxu0
      %v450 = vpop.f32.mrb[0].mxu0
      %v451 = vadd.f32 %v279, %v450
      %v452 = vpop.f32.mrb[0].mxu0
      %453 = vdwg.mxu0
      %v454 = vtanh.pop %v392
      %v455 = vtanh.pop %v395
      %v456 = vtanh.pop %v400
      %v457 = vtanh.pop %v403
      %v458 = vtanh.pop %v408
      %v459 = vtanh.pop %v411
      %v460 = vtanh.pop %v416
      %v461 = vtanh.pop %v419
      %v462 = vtanh.pop %v424
      %v463 = vtanh.pop %v427
      %v464 = vtanh.pop %v432
      %v465 = vtanh.pop %v435
      %v466 = vtanh.pop %v440
      %v467 = vtanh.pop %v443
      %v468 = vtanh.pop %v448
      %v469 = vtanh.pop %v451
      %v470 = vpack.c.bf16 %v455, %v454
      %v471 = vpack.c.bf16 %v457, %v456
      %v472 = vpack.c.bf16 %v459, %v458
      %v473 = vpack.c.bf16 %v461, %v460
      %v474 = vpack.c.bf16 %v463, %v462
      %v475 = vpack.c.bf16 %v465, %v464
      %v476 = vpack.c.bf16 %v467, %v466
      %v477 = vpack.c.bf16 %v469, %v468
      %v478 = vld [vmem:[%s2 + $0x10] sm:$0xf]
      %v479 = vld [vmem:[%s2 + $0x14] sm:$0xf]
      %v480 = vld [vmem:[%s2 + $0x18] sm:$0xf]
      %v481 = vld [vmem:[%s2 + $0x1c] sm:$0xf]
      %v482 = vld [vmem:[%s2 + $0x20] sm:$0xf]
      %v483 = vld [vmem:[%s2 + $0x24] sm:$0xf]
      %v484 = vld [vmem:[%s2 + $0x28] sm:$0xf]
      %v485 = vld [vmem:[%s2 + $0x2c] sm:$0xf]
      %v486 = vld [vmem:[%s2 + $0x30] sm:$0xf]
      %v487 = vld [vmem:[%s2 + $0x34] sm:$0xf]
      %v488 = vld [vmem:[%s2 + $0x38] sm:$0xf]
      %v489 = vld [vmem:[%s2 + $0x3c] sm:$0xf]
      %v490 = vld [vmem:[%s2 + $0x40] sm:$0xf]
      %v491 = vld [vmem:[%s2 + $0x44] sm:$0xf]
      %v492 = vld [vmem:[%s2 + $0x48] sm:$0xf]
      %v493 = vld [vmem:[%s2 + $0x4c] sm:$0xf]
      %v494 = vlaneseq
      %v495 = vshrl.u32 %v494, 7
      %v496 = vsub.s32 0, %v495
      %v497 = vrot.slane %v252, %v496
      %v514 = vunpack.c.l.b16 %v478
      %v515 = vunpack.c.l.b16 %v479
      %v516 = vunpack.c.l.b16 %v480
      %v517 = vunpack.c.l.b16 %v481
      %v518 = vunpack.c.l.b16 %v482
      %v519 = vunpack.c.l.b16 %v483
      %v520 = vunpack.c.l.b16 %v484
      %v521 = vunpack.c.l.b16 %v485
      %v522 = vunpack.c.l.b16 %v486
      %v523 = vunpack.c.l.b16 %v487
      %v524 = vunpack.c.l.b16 %v488
      %v525 = vunpack.c.l.b16 %v489
      %v526 = vunpack.c.l.b16 %v490
      %v527 = vunpack.c.l.b16 %v491
      %v528 = vunpack.c.l.b16 %v492
      %v529 = vunpack.c.l.b16 %v493
      %v530 = vpack.c.b16 %v515, %v514
      %v531 = vpack.c.b16 %v517, %v516
      %v532 = vpack.c.b16 %v519, %v518
      %v533 = vpack.c.b16 %v521, %v520
      %v534 = vpack.c.b16 %v523, %v522
      %v535 = vpack.c.b16 %v525, %v524
      %v536 = vpack.c.b16 %v527, %v526
      %v537 = vpack.c.b16 %v529, %v528
      %546 = vmatprep.subr.bf16.mxu0 0
      %547 = vmatpush1.bf16.msra.mxu0 %v530
      %548 = vmatprep.subr.bf16.mxu0 0
      %549 = vmatpush1.bf16.msra.mxu0 %v531
      %550 = vmatprep.subr.bf16.mxu0 0
      %551 = vmatpush1.bf16.msra.mxu0 %v532
      %552 = vmatprep.subr.bf16.mxu0 0
      %553 = vmatpush1.bf16.msra.mxu0 %v533
      %554 = vmatprep.subr.bf16.mxu0 0
      %555 = vmatpush1.bf16.msra.mxu0 %v534
      %556 = vmatprep.subr.bf16.mxu0 0
      %557 = vmatpush1.bf16.msra.mxu0 %v535
      %558 = vmatprep.subr.bf16.mxu0 0
      %559 = vmatpush1.bf16.msra.mxu0 %v536
      %560 = vmatprep.subr.bf16.mxu0 0
      %561 = vmatpush1.bf16.msra.mxu0 %v537
      %562 = vmatprep.subr.bf16.mxu0 0
      %563 = vmatpush1.bf16.msra.mxu0 0
      %564 = vmatprep.subr.bf16.mxu0 0
      %565 = vmatpush1.bf16.msra.mxu0 0
      %566 = vmatprep.subr.bf16.mxu0 0
      %567 = vmatpush1.bf16.msra.mxu0 0
      %568 = vmatprep.subr.bf16.mxu0 0
      %569 = vmatpush1.bf16.msra.mxu0 0
      %570 = vmatprep.subr.bf16.mxu0 0
      %571 = vmatpush1.bf16.msra.mxu0 0
      %572 = vmatprep.subr.bf16.mxu0 0
      %573 = vmatpush1.bf16.msra.mxu0 0
      %574 = vmatprep.subr.bf16.mxu0 0
      %575 = vmatpush1.bf16.msra.mxu0 0
      %576 = vmatprep.subr.bf16.mxu0 0
      %577 = vmatpush1.bf16.msra.mxu0 0
      %578 = vmatprep.mubr.bf16.mxu0 0
      %579 = vmatmul.mubr.bf16.gmra.mrb[0].mxu0 %v470
      %v580 = vpop.f32.mrb[0].mxu0
      %v581 = vadd.f32 %v497, %v580
      %v582 = vpop.f32.mrb[0].mxu0
      %v583 = vpop.f32.mrb[0].mxu0
      %v584 = vadd.f32 %v497, %v583
      %v585 = vpop.f32.mrb[0].mxu0
      %586 = vmatprep.mubr.bf16.mxu0 0
      %587 = vmatmul.mubr.bf16.gmra.mrb[0].mxu0 %v471
      %v588 = vpop.f32.mrb[0].mxu0
      %v589 = vadd.f32 %v497, %v588
      %v590 = vpop.f32.mrb[0].mxu0
      %v591 = vpop.f32.mrb[0].mxu0
      %v592 = vadd.f32 %v497, %v591
      %v593 = vpop.f32.mrb[0].mxu0
      %594 = vmatprep.mubr.bf16.mxu0 0
      %595 = vmatmul.mubr.bf16.gmra.mrb[0].mxu0 %v472
      %v596 = vpop.f32.mrb[0].mxu0
      %v597 = vadd.f32 %v497, %v596
      %v598 = vpop.f32.mrb[0].mxu0
      %v599 = vpop.f32.mrb[0].mxu0
      %v600 = vadd.f32 %v497, %v599
      %v601 = vpop.f32.mrb[0].mxu0
      %602 = vmatprep.mubr.bf16.mxu0 0
      %603 = vmatmul.mubr.bf16.gmra.mrb[0].mxu0 %v473
      %v604 = vpop.f32.mrb[0].mxu0
      %v605 = vadd.f32 %v497, %v604
      %v606 = vpop.f32.mrb[0].mxu0
      %v607 = vpop.f32.mrb[0].mxu0
      %v608 = vadd.f32 %v497, %v607
      %v609 = vpop.f32.mrb[0].mxu0
      %610 = vmatprep.mubr.bf16.mxu0 0
      %611 = vmatmul.mubr.bf16.gmra.mrb[0].mxu0 %v474
      %v612 = vpop.f32.mrb[0].mxu0
      %v613 = vadd.f32 %v497, %v612
      %v614 = vpop.f32.mrb[0].mxu0
      %v615 = vpop.f32.mrb[0].mxu0
      %v616 = vadd.f32 %v497, %v615
      %v617 = vpop.f32.mrb[0].mxu0
      %618 = vmatprep.mubr.bf16.mxu0 0
      %619 = vmatmul.mubr.bf16.gmra.mrb[0].mxu0 %v475
      %v620 = vpop.f32.mrb[0].mxu0
      %v621 = vadd.f32 %v497, %v620
      %v622 = vpop.f32.mrb[0].mxu0
      %v623 = vpop.f32.mrb[0].mxu0
      %v624 = vadd.f32 %v497, %v623
      %v625 = vpop.f32.mrb[0].mxu0
      %626 = vmatprep.mubr.bf16.mxu0 0
      %627 = vmatmul.mubr.bf16.gmra.mrb[0].mxu0 %v476
      %v628 = vpop.f32.mrb[0].mxu0
      %v629 = vadd.f32 %v497, %v628
      %v630 = vpop.f32.mrb[0].mxu0
      %v631 = vpop.f32.mrb[0].mxu0
      %v632 = vadd.f32 %v497, %v631
      %v633 = vpop.f32.mrb[0].mxu0
      %634 = vmatprep.mubr.bf16.mxu0 0
      %635 = vmatmul.mubr.bf16.gmra.mrb[0].mxu0 %v477
      %v636 = vpop.f32.mrb[0].mxu0
      %v637 = vadd.f32 %v497, %v636
      %v638 = vpop.f32.mrb[0].mxu0
      %v639 = vpop.f32.mrb[0].mxu0
      %v640 = vadd.f32 %v497, %v639
      %v641 = vpop.f32.mrb[0].mxu0
      %642 = vdwg.mxu0
      %v643 = vtanh.pop %v581
      %v644 = vtanh.pop %v584
      %v645 = vtanh.pop %v589
      %v646 = vtanh.pop %v592
      %v647 = vtanh.pop %v597
      %v648 = vtanh.pop %v600
      %v649 = vtanh.pop %v605
      %v650 = vtanh.pop %v608
      %v651 = vtanh.pop %v613
      %v652 = vtanh.pop %v616
      %v653 = vtanh.pop %v621
      %v654 = vtanh.pop %v624
      %v655 = vtanh.pop %v629
      %v656 = vtanh.pop %v632
      %v657 = vtanh.pop %v637
      %v658 = vtanh.pop %v640
      %v659 = vpack.c.bf16 %v644, %v643
      %v660 = vpack.c.bf16 %v646, %v645
      %v661 = vpack.c.bf16 %v648, %v647
      %v662 = vpack.c.bf16 %v650, %v649
      %v663 = vpack.c.bf16 %v652, %v651
      %v664 = vpack.c.bf16 %v654, %v653
      %v665 = vpack.c.bf16 %v656, %v655
      %v666 = vpack.c.bf16 %v658, %v657
      %v667 = vld [vmem:[%s2 + $0x50] sm:$0xf]
      %v668 = vld [vmem:[%s2 + $0x54] sm:$0xf]
      %v669 = vld [vmem:[%s2 + $0x58] sm:$0xf]
      %v670 = vld [vmem:[%s2 + $0x5c] sm:$0xf]
      %v671 = vld [vmem:[%s2 + $0x60] sm:$0xf]
      %v672 = vld [vmem:[%s2 + $0x64] sm:$0xf]
      %v673 = vld [vmem:[%s2 + $0x68] sm:$0xf]
      %v674 = vld [vmem:[%s2 + $0x6c] sm:$0xf]
      %v675 = vld [vmem:[%s2 + $0x70] sm:$0xf]
      %v676 = vld [vmem:[%s2 + $0x74] sm:$0xf]
      %v677 = vld [vmem:[%s2 + $0x78] sm:$0xf]
      %v678 = vld [vmem:[%s2 + $0x7c] sm:$0xf]
      %v679 = vld [vmem:[%s2 + $0x80] sm:$0xf]
      %v680 = vld [vmem:[%s2 + $0x84] sm:$0xf]
      %v681 = vld [vmem:[%s2 + $0x88] sm:$0xf]
      %v682 = vld [vmem:[%s2 + $0x8c] sm:$0xf]
      %v683 = vlaneseq
      %v684 = vshrl.u32 %v683, 7
      %v685 = vsub.s32 0, %v684
      %v686 = vrot.slane %v253, %v685
      %v703 = vunpack.c.l.b16 %v667
      %v704 = vunpack.c.l.b16 %v668
      %v705 = vunpack.c.l.b16 %v669
      %v706 = vunpack.c.l.b16 %v670
      %v707 = vunpack.c.l.b16 %v671
      %v708 = vunpack.c.l.b16 %v672
      %v709 = vunpack.c.l.b16 %v673
      %v710 = vunpack.c.l.b16 %v674
      %v711 = vunpack.c.l.b16 %v675
      %v712 = vunpack.c.l.b16 %v676
      %v713 = vunpack.c.l.b16 %v677
      %v714 = vunpack.c.l.b16 %v678
      %v715 = vunpack.c.l.b16 %v679
      %v716 = vunpack.c.l.b16 %v680
      %v717 = vunpack.c.l.b16 %v681
      %v718 = vunpack.c.l.b16 %v682
      %v719 = vpack.c.b16 %v704, %v703
      %v720 = vpack.c.b16 %v706, %v705
      %v721 = vpack.c.b16 %v708, %v707
      %v722 = vpack.c.b16 %v710, %v709
      %v723 = vpack.c.b16 %v712, %v711
      %v724 = vpack.c.b16 %v714, %v713
      %v725 = vpack.c.b16 %v716, %v715
      %v726 = vpack.c.b16 %v718, %v717
      %735 = vmatprep.subr.bf16.mxu0 0
      %736 = vmatpush1.bf16.msra.mxu0 %v719
      %737 = vmatprep.subr.bf16.mxu0 0
      %738 = vmatpush1.bf16.msra.mxu0 %v720
      %739 = vmatprep.subr.bf16.mxu0 0
      %740 = vmatpush1.bf16.msra.mxu0 %v721
      %741 = vmatprep.subr.bf16.mxu0 0
      %742 = vmatpush1.bf16.msra.mxu0 %v722
      %743 = vmatprep.subr.bf16.mxu0 0
      %744 = vmatpush1.bf16.msra.mxu0 %v723
      %745 = vmatprep.subr.bf16.mxu0 0
      %746 = vmatpush1.bf16.msra.mxu0 %v724
      %747 = vmatprep.subr.bf16.mxu0 0
      %748 = vmatpush1.bf16.msra.mxu0 %v725
      %749 = vmatprep.subr.bf16.mxu0 0
      %750 = vmatpush1.bf16.msra.mxu0 %v726
      %751 = vmatprep.subr.bf16.mxu0 0
      %752 = vmatpush1.bf16.msra.mxu0 0
      %753 = vmatprep.subr.bf16.mxu0 0
      %754 = vmatpush1.bf16.msra.mxu0 0
      %755 = vmatprep.subr.bf16.mxu0 0
      %756 = vmatpush1.bf16.msra.mxu0 0
      %757 = vmatprep.subr.bf16.mxu0 0
      %758 = vmatpush1.bf16.msra.mxu0 0
      %759 = vmatprep.subr.bf16.mxu0 0
      %760 = vmatpush1.bf16.msra.mxu0 0
      %761 = vmatprep.subr.bf16.mxu0 0
      %762 = vmatpush1.bf16.msra.mxu0 0
      %763 = vmatprep.subr.bf16.mxu0 0
      %764 = vmatpush1.bf16.msra.mxu0 0
      %765 = vmatprep.subr.bf16.mxu0 0
      %766 = vmatpush1.bf16.msra.mxu0 0
      %767 = vmatprep.mubr.bf16.mxu0 0
      %768 = vmatmul.mubr.bf16.gmra.mrb[0].mxu0 %v659
      %v769 = vpop.f32.mrb[0].mxu0
      %v770 = vadd.f32 %v686, %v769
      %v771 = vpop.f32.mrb[0].mxu0
      %v772 = vpop.f32.mrb[0].mxu0
      %v773 = vadd.f32 %v686, %v772
      %v774 = vpop.f32.mrb[0].mxu0
      %775 = vmatprep.mubr.bf16.mxu0 0
      %776 = vmatmul.mubr.bf16.gmra.mrb[0].mxu0 %v660
      %v777 = vpop.f32.mrb[0].mxu0
      %v778 = vadd.f32 %v686, %v777
      %v779 = vpop.f32.mrb[0].mxu0
      %v780 = vpop.f32.mrb[0].mxu0
      %v781 = vadd.f32 %v686, %v780
      %v782 = vpop.f32.mrb[0].mxu0
      %783 = vmatprep.mubr.bf16.mxu0 0
      %784 = vmatmul.mubr.bf16.gmra.mrb[0].mxu0 %v661
      %v785 = vpop.f32.mrb[0].mxu0
      %v786 = vadd.f32 %v686, %v785
      %v787 = vpop.f32.mrb[0].mxu0
      %v788 = vpop.f32.mrb[0].mxu0
      %v789 = vadd.f32 %v686, %v788
      %v790 = vpop.f32.mrb[0].mxu0
      %791 = vmatprep.mubr.bf16.mxu0 0
      %792 = vmatmul.mubr.bf16.gmra.mrb[0].mxu0 %v662
      %v793 = vpop.f32.mrb[0].mxu0
      %v794 = vadd.f32 %v686, %v793
      %v795 = vpop.f32.mrb[0].mxu0
      %v796 = vpop.f32.mrb[0].mxu0
      %v797 = vadd.f32 %v686, %v796
      %v798 = vpop.f32.mrb[0].mxu0
      %799 = vmatprep.mubr.bf16.mxu0 0
      %800 = vmatmul.mubr.bf16.gmra.mrb[0].mxu0 %v663
      %v801 = vpop.f32.mrb[0].mxu0
      %v802 = vadd.f32 %v686, %v801
      %v803 = vpop.f32.mrb[0].mxu0
      %v804 = vpop.f32.mrb[0].mxu0
      %v805 = vadd.f32 %v686, %v804
      %v806 = vpop.f32.mrb[0].mxu0
      %807 = vmatprep.mubr.bf16.mxu0 0
      %808 = vmatmul.mubr.bf16.gmra.mrb[0].mxu0 %v664
      %v809 = vpop.f32.mrb[0].mxu0
      %v810 = vadd.f32 %v686, %v809
      %v811 = vpop.f32.mrb[0].mxu0
      %v812 = vpop.f32.mrb[0].mxu0
      %v813 = vadd.f32 %v686, %v812
      %v814 = vpop.f32.mrb[0].mxu0
      %815 = vmatprep.mubr.bf16.mxu0 0
      %816 = vmatmul.mubr.bf16.gmra.mrb[0].mxu0 %v665
      %v817 = vpop.f32.mrb[0].mxu0
      %v818 = vadd.f32 %v686, %v817
      %v819 = vpop.f32.mrb[0].mxu0
      %v820 = vpop.f32.mrb[0].mxu0
      %v821 = vadd.f32 %v686, %v820
      %v822 = vpop.f32.mrb[0].mxu0
      %823 = vmatprep.mubr.bf16.mxu0 0
      %824 = vmatmul.mubr.bf16.gmra.mrb[0].mxu0 %v666
      %v825 = vpop.f32.mrb[0].mxu0
      %v826 = vadd.f32 %v686, %v825
      %v827 = vpop.f32.mrb[0].mxu0
      %v828 = vpop.f32.mrb[0].mxu0
      %v829 = vadd.f32 %v686, %v828
      %v830 = vpop.f32.mrb[0].mxu0
      %831 = vdwg.mxu0
      %v832 = vld [vmem:[%s242] sm:$0xf]
      %v833 = vld [vmem:[%s242 + $0x4] sm:$0xf]
      %v834 = vld [vmem:[%s242 + $0x8] sm:$0xf]
      %v835 = vld [vmem:[%s242 + $0xc] sm:$0xf]
      %v836 = vld [vmem:[%s242 + $0x10] sm:$0xf]
      %v837 = vld [vmem:[%s242 + $0x14] sm:$0xf]
      %v838 = vld [vmem:[%s242 + $0x18] sm:$0xf]
      %v839 = vld [vmem:[%s242 + $0x1c] sm:$0xf]
      %v840 = vld [vmem:[%s242 + $0x20] sm:$0xf]
      %v841 = vld [vmem:[%s242 + $0x24] sm:$0xf]
      %v842 = vld [vmem:[%s242 + $0x28] sm:$0xf]
      %v843 = vld [vmem:[%s242 + $0x2c] sm:$0xf]
      %v844 = vld [vmem:[%s242 + $0x30] sm:$0xf]
      %v845 = vld [vmem:[%s242 + $0x34] sm:$0xf]
      %v846 = vld [vmem:[%s242 + $0x38] sm:$0xf]
      %v847 = vld [vmem:[%s242 + $0x3c] sm:$0xf]
      %v848 = vld [vmem:[%s2 + $0x90] sm:$0xf]
      %v849 = vld [vmem:[%s2 + $0x94] sm:$0xf]
      %v850 = vlaneseq
      %v851 = vshrl.u32 %v850, 7
      %v852 = vsub.s32 0, %v851
      %v853 = vrot.slane %v254, %v852
      %v870 = vunpack.c.l.b16 %v832
      %v871 = vunpack.c.l.b16 %v833
      %v872 = vunpack.c.l.b16 %v834
      %v873 = vunpack.c.l.b16 %v835
      %v874 = vunpack.c.l.b16 %v836
      %v875 = vunpack.c.l.b16 %v837
      %v876 = vunpack.c.l.b16 %v838
      %v877 = vunpack.c.l.b16 %v839
      %v878 = vunpack.c.l.b16 %v840
      %v879 = vunpack.c.l.b16 %v841
      %v880 = vunpack.c.l.b16 %v842
      %v881 = vunpack.c.l.b16 %v843
      %v882 = vunpack.c.l.b16 %v844
      %v883 = vunpack.c.l.b16 %v845
      %v884 = vunpack.c.l.b16 %v846
      %v885 = vunpack.c.l.b16 %v847
      %v886 = vpack.c.b16 %v871, %v870
      %v887 = vpack.c.b16 %v873, %v872
      %v888 = vpack.c.b16 %v875, %v874
      %v889 = vpack.c.b16 %v877, %v876
      %v890 = vpack.c.b16 %v879, %v878
      %v891 = vpack.c.b16 %v881, %v880
      %v892 = vpack.c.b16 %v883, %v882
      %v893 = vpack.c.b16 %v885, %v884
      %v896 = vunpack.c.l.b16 %v848
      %v897 = vunpack.c.l.b16 %v849
      %v898 = vpack.c.b16 %v897, %v896
      %vm900 = vcmask 130048
      %v902 = vsel %vm900, %v886, 0
      %v905 = vsel %vm900, %v887, 0
      %v908 = vsel %vm900, %v888, 0
      %v911 = vsel %vm900, %v889, 0
      %v914 = vsel %vm900, %v890, 0
      %v917 = vsel %vm900, %v891, 0
      %v920 = vsel %vm900, %v892, 0
      %v923 = vsel %vm900, %v893, 0
      %925 = vmatprep.subr.bf16.mxu0 0
      %926 = vmatpush1.bf16.msra.mxu0 %v898
      %927 = vmatprep.subr.bf16.mxu0 0
      %928 = vmatpush1.bf16.msra.mxu0 0
      %929 = vmatprep.subr.bf16.mxu0 0
      %930 = vmatpush1.bf16.msra.mxu0 0
      %931 = vmatprep.subr.bf16.mxu0 0
      %932 = vmatpush1.bf16.msra.mxu0 0
      %933 = vmatprep.subr.bf16.mxu0 0
      %934 = vmatpush1.bf16.msra.mxu0 0
      %935 = vmatprep.subr.bf16.mxu0 0
      %936 = vmatpush1.bf16.msra.mxu0 0
      %937 = vmatprep.subr.bf16.mxu0 0
      %938 = vmatpush1.bf16.msra.mxu0 0
      %939 = vmatprep.subr.bf16.mxu0 0
      %940 = vmatpush1.bf16.msra.mxu0 0
      %941 = vmatprep.subr.bf16.mxu0 0
      %942 = vmatpush1.bf16.msra.mxu0 0
      %943 = vmatprep.subr.bf16.mxu0 0
      %944 = vmatpush1.bf16.msra.mxu0 0
      %945 = vmatprep.subr.bf16.mxu0 0
      %946 = vmatpush1.bf16.msra.mxu0 0
      %947 = vmatprep.subr.bf16.mxu0 0
      %948 = vmatpush1.bf16.msra.mxu0 0
      %949 = vmatprep.subr.bf16.mxu0 0
      %950 = vmatpush1.bf16.msra.mxu0 0
      %951 = vmatprep.subr.bf16.mxu0 0
      %952 = vmatpush1.bf16.msra.mxu0 0
      %953 = vmatprep.subr.bf16.mxu0 0
      %954 = vmatpush1.bf16.msra.mxu0 0
      %955 = vmatprep.subr.bf16.mxu0 0
      %956 = vmatpush1.bf16.msra.mxu0 0
      %957 = vmatprep.mubr.bf16.mxu0 0
      %958 = vmatmul.mubr.bf16.gmra.mrb[0].mxu0 %v902
      %v959 = vpop.f32.mrb[0].mxu0
      %v960 = vadd.f32 %v853, %v959
      %v961 = vpop.f32.mrb[0].mxu0
      %v962 = vpop.f32.mrb[0].mxu0
      %v963 = vadd.f32 %v853, %v962
      %v964 = vpop.f32.mrb[0].mxu0
      %965 = vmatprep.mubr.bf16.mxu0 0
      %966 = vmatmul.mubr.bf16.gmra.mrb[0].mxu0 %v905
      %v967 = vpop.f32.mrb[0].mxu0
      %v968 = vadd.f32 %v853, %v967
      %v969 = vpop.f32.mrb[0].mxu0
      %v970 = vpop.f32.mrb[0].mxu0
      %v971 = vadd.f32 %v853, %v970
      %v972 = vpop.f32.mrb[0].mxu0
      %973 = vmatprep.mubr.bf16.mxu0 0
      %974 = vmatmul.mubr.bf16.gmra.mrb[0].mxu0 %v908
      %v975 = vpop.f32.mrb[0].mxu0
      %v976 = vadd.f32 %v853, %v975
      %v977 = vpop.f32.mrb[0].mxu0
      %v978 = vpop.f32.mrb[0].mxu0
      %v979 = vadd.f32 %v853, %v978
      %v980 = vpop.f32.mrb[0].mxu0
      %981 = vmatprep.mubr.bf16.mxu0 0
      %982 = vmatmul.mubr.bf16.gmra.mrb[0].mxu0 %v911
      %v983 = vpop.f32.mrb[0].mxu0
      %v984 = vadd.f32 %v853, %v983
      %v985 = vpop.f32.mrb[0].mxu0
      %v986 = vpop.f32.mrb[0].mxu0
      %v987 = vadd.f32 %v853, %v986
      %v988 = vpop.f32.mrb[0].mxu0
      %989 = vmatprep.mubr.bf16.mxu0 0
      %990 = vmatmul.mubr.bf16.gmra.mrb[0].mxu0 %v914
      %v991 = vpop.f32.mrb[0].mxu0
      %v992 = vadd.f32 %v853, %v991
      %v993 = vpop.f32.mrb[0].mxu0
      %v994 = vpop.f32.mrb[0].mxu0
      %v995 = vadd.f32 %v853, %v994
      %v996 = vpop.f32.mrb[0].mxu0
      %997 = vmatprep.mubr.bf16.mxu0 0
      %998 = vmatmul.mubr.bf16.gmra.mrb[0].mxu0 %v917
      %v999 = vpop.f32.mrb[0].mxu0
      %v1000 = vadd.f32 %v853, %v999
      %v1001 = vpop.f32.mrb[0].mxu0
      %v1002 = vpop.f32.mrb[0].mxu0
      %v1003 = vadd.f32 %v853, %v1002
      %v1004 = vpop.f32.mrb[0].mxu0
      %1005 = vmatprep.mubr.bf16.mxu0 0
      %1006 = vmatmul.mubr.bf16.gmra.mrb[0].mxu0 %v920
      %v1007 = vpop.f32.mrb[0].mxu0
      %v1008 = vadd.f32 %v853, %v1007
      %v1009 = vpop.f32.mrb[0].mxu0
      %v1010 = vpop.f32.mrb[0].mxu0
      %v1011 = vadd.f32 %v853, %v1010
      %v1012 = vpop.f32.mrb[0].mxu0
      %1013 = vmatprep.mubr.bf16.mxu0 0
      %1014 = vmatmul.mubr.bf16.gmra.mrb[0].mxu0 %v923
      %v1015 = vpop.f32.mrb[0].mxu0
      %v1016 = vadd.f32 %v853, %v1015
      %v1017 = vpop.f32.mrb[0].mxu0
      %v1018 = vpop.f32.mrb[0].mxu0
      %v1019 = vadd.f32 %v853, %v1018
      %v1020 = vpop.f32.mrb[0].mxu0
      %1021 = vdwg.mxu0
      %v1022 = vtanh.pop %v960
      %v1023 = vtanh.pop %v963
      %v1024 = vtanh.pop %v968
      %v1025 = vtanh.pop %v971
      %v1026 = vtanh.pop %v976
      %v1027 = vtanh.pop %v979
      %v1028 = vtanh.pop %v984
      %v1029 = vtanh.pop %v987
      %v1030 = vtanh.pop %v992
      %v1031 = vtanh.pop %v995
      %v1032 = vtanh.pop %v1000
      %v1033 = vtanh.pop %v1003
      %v1034 = vtanh.pop %v1008
      %v1035 = vtanh.pop %v1011
      %v1036 = vtanh.pop %v1016
      %v1037 = vtanh.pop %v1019
      %v1038 = vpack.c.bf16 %v1023, %v1022
      %v1039 = vpack.c.bf16 %v1025, %v1024
      %v1040 = vpack.c.bf16 %v1027, %v1026
      %v1041 = vpack.c.bf16 %v1029, %v1028
      %v1042 = vpack.c.bf16 %v1031, %v1030
      %v1043 = vpack.c.bf16 %v1033, %v1032
      %v1044 = vpack.c.bf16 %v1035, %v1034
      %v1045 = vpack.c.bf16 %v1037, %v1036
      %v1046 = vld [vmem:[%s2 + $0x98] sm:$0xf]
      %v1047 = vld [vmem:[%s2 + $0x9c] sm:$0xf]
      %v1048 = vld [vmem:[%s2 + $0xa0] sm:$0xf]
      %v1049 = vld [vmem:[%s2 + $0xa4] sm:$0xf]
      %v1050 = vld [vmem:[%s2 + $0xa8] sm:$0xf]
      %v1051 = vld [vmem:[%s2 + $0xac] sm:$0xf]
      %v1052 = vld [vmem:[%s2 + $0xb0] sm:$0xf]
      %v1053 = vld [vmem:[%s2 + $0xb4] sm:$0xf]
      %v1054 = vld [vmem:[%s2 + $0xb8] sm:$0xf]
      %v1055 = vld [vmem:[%s2 + $0xbc] sm:$0xf]
      %v1056 = vld [vmem:[%s2 + $0xc0] sm:$0xf]
      %v1057 = vld [vmem:[%s2 + $0xc4] sm:$0xf]
      %v1058 = vld [vmem:[%s2 + $0xc8] sm:$0xf]
      %v1059 = vld [vmem:[%s2 + $0xcc] sm:$0xf]
      %v1060 = vld [vmem:[%s2 + $0xd0] sm:$0xf]
      %v1061 = vld [vmem:[%s2 + $0xd4] sm:$0xf]
      %v1062 = vlaneseq
      %v1063 = vshrl.u32 %v1062, 7
      %v1064 = vsub.s32 0, %v1063
      %v1065 = vrot.slane %v255, %v1064
      %v1082 = vunpack.c.l.b16 %v1046
      %v1083 = vunpack.c.l.b16 %v1047
      %v1084 = vunpack.c.l.b16 %v1048
      %v1085 = vunpack.c.l.b16 %v1049
      %v1086 = vunpack.c.l.b16 %v1050
      %v1087 = vunpack.c.l.b16 %v1051
      %v1088 = vunpack.c.l.b16 %v1052
      %v1089 = vunpack.c.l.b16 %v1053
      %v1090 = vunpack.c.l.b16 %v1054
      %v1091 = vunpack.c.l.b16 %v1055
      %v1092 = vunpack.c.l.b16 %v1056
      %v1093 = vunpack.c.l.b16 %v1057
      %v1094 = vunpack.c.l.b16 %v1058
      %v1095 = vunpack.c.l.b16 %v1059
      %v1096 = vunpack.c.l.b16 %v1060
      %v1097 = vunpack.c.l.b16 %v1061
      %v1098 = vpack.c.b16 %v1083, %v1082
      %v1099 = vpack.c.b16 %v1085, %v1084
      %v1100 = vpack.c.b16 %v1087, %v1086
      %v1101 = vpack.c.b16 %v1089, %v1088
      %v1102 = vpack.c.b16 %v1091, %v1090
      %v1103 = vpack.c.b16 %v1093, %v1092
      %v1104 = vpack.c.b16 %v1095, %v1094
      %v1105 = vpack.c.b16 %v1097, %v1096
      %1114 = vmatprep.subr.bf16.mxu0 0
      %1115 = vmatpush1.bf16.msra.mxu0 %v1098
      %1116 = vmatprep.subr.bf16.mxu0 0
      %1117 = vmatpush1.bf16.msra.mxu0 %v1099
      %1118 = vmatprep.subr.bf16.mxu0 0
      %1119 = vmatpush1.bf16.msra.mxu0 %v1100
      %1120 = vmatprep.subr.bf16.mxu0 0
      %1121 = vmatpush1.bf16.msra.mxu0 %v1101
      %1122 = vmatprep.subr.bf16.mxu0 0
      %1123 = vmatpush1.bf16.msra.mxu0 %v1102
      %1124 = vmatprep.subr.bf16.mxu0 0
      %1125 = vmatpush1.bf16.msra.mxu0 %v1103
      %1126 = vmatprep.subr.bf16.mxu0 0
      %1127 = vmatpush1.bf16.msra.mxu0 %v1104
      %1128 = vmatprep.subr.bf16.mxu0 0
      %1129 = vmatpush1.bf16.msra.mxu0 %v1105
      %1130 = vmatprep.subr.bf16.mxu0 0
      %1131 = vmatpush1.bf16.msra.mxu0 0
      %1132 = vmatprep.subr.bf16.mxu0 0
      %1133 = vmatpush1.bf16.msra.mxu0 0
      %1134 = vmatprep.subr.bf16.mxu0 0
      %1135 = vmatpush1.bf16.msra.mxu0 0
      %1136 = vmatprep.subr.bf16.mxu0 0
      %1137 = vmatpush1.bf16.msra.mxu0 0
      %1138 = vmatprep.subr.bf16.mxu0 0
      %1139 = vmatpush1.bf16.msra.mxu0 0
      %1140 = vmatprep.subr.bf16.mxu0 0
      %1141 = vmatpush1.bf16.msra.mxu0 0
      %1142 = vmatprep.subr.bf16.mxu0 0
      %1143 = vmatpush1.bf16.msra.mxu0 0
      %1144 = vmatprep.subr.bf16.mxu0 0
      %1145 = vmatpush1.bf16.msra.mxu0 0
      %1146 = vmatprep.mubr.bf16.mxu0 0
      %1147 = vmatmul.mubr.bf16.gmra.mrb[0].mxu0 %v1038
      %v1148 = vpop.f32.mrb[0].mxu0
      %v1149 = vadd.f32 %v1065, %v1148
      %v1150 = vpop.f32.mrb[0].mxu0
      %v1151 = vpop.f32.mrb[0].mxu0
      %v1152 = vadd.f32 %v1065, %v1151
      %v1153 = vpop.f32.mrb[0].mxu0
      %1154 = vmatprep.mubr.bf16.mxu0 0
      %1155 = vmatmul.mubr.bf16.gmra.mrb[0].mxu0 %v1039
      %v1156 = vpop.f32.mrb[0].mxu0
      %v1157 = vadd.f32 %v1065, %v1156
      %v1158 = vpop.f32.mrb[0].mxu0
      %v1159 = vpop.f32.mrb[0].mxu0
      %v1160 = vadd.f32 %v1065, %v1159
      %v1161 = vpop.f32.mrb[0].mxu0
      %1162 = vmatprep.mubr.bf16.mxu0 0
      %1163 = vmatmul.mubr.bf16.gmra.mrb[0].mxu0 %v1040
      %v1164 = vpop.f32.mrb[0].mxu0
      %v1165 = vadd.f32 %v1065, %v1164
      %v1166 = vpop.f32.mrb[0].mxu0
      %v1167 = vpop.f32.mrb[0].mxu0
      %v1168 = vadd.f32 %v1065, %v1167
      %v1169 = vpop.f32.mrb[0].mxu0
      %1170 = vmatprep.mubr.bf16.mxu0 0
      %1171 = vmatmul.mubr.bf16.gmra.mrb[0].mxu0 %v1041
      %v1172 = vpop.f32.mrb[0].mxu0
      %v1173 = vadd.f32 %v1065, %v1172
      %v1174 = vpop.f32.mrb[0].mxu0
      %v1175 = vpop.f32.mrb[0].mxu0
      %v1176 = vadd.f32 %v1065, %v1175
      %v1177 = vpop.f32.mrb[0].mxu0
      %1178 = vmatprep.mubr.bf16.mxu0 0
      %1179 = vmatmul.mubr.bf16.gmra.mrb[0].mxu0 %v1042
      %v1180 = vpop.f32.mrb[0].mxu0
      %v1181 = vadd.f32 %v1065, %v1180
      %v1182 = vpop.f32.mrb[0].mxu0
      %v1183 = vpop.f32.mrb[0].mxu0
      %v1184 = vadd.f32 %v1065, %v1183
      %v1185 = vpop.f32.mrb[0].mxu0
      %1186 = vmatprep.mubr.bf16.mxu0 0
      %1187 = vmatmul.mubr.bf16.gmra.mrb[0].mxu0 %v1043
      %v1188 = vpop.f32.mrb[0].mxu0
      %v1189 = vadd.f32 %v1065, %v1188
      %v1190 = vpop.f32.mrb[0].mxu0
      %v1191 = vpop.f32.mrb[0].mxu0
      %v1192 = vadd.f32 %v1065, %v1191
      %v1193 = vpop.f32.mrb[0].mxu0
      %1194 = vmatprep.mubr.bf16.mxu0 0
      %1195 = vmatmul.mubr.bf16.gmra.mrb[0].mxu0 %v1044
      %v1196 = vpop.f32.mrb[0].mxu0
      %v1197 = vadd.f32 %v1065, %v1196
      %v1198 = vpop.f32.mrb[0].mxu0
      %v1199 = vpop.f32.mrb[0].mxu0
      %v1200 = vadd.f32 %v1065, %v1199
      %v1201 = vpop.f32.mrb[0].mxu0
      %1202 = vmatprep.mubr.bf16.mxu0 0
      %1203 = vmatmul.mubr.bf16.gmra.mrb[0].mxu0 %v1045
      %v1204 = vpop.f32.mrb[0].mxu0
      %v1205 = vadd.f32 %v1065, %v1204
      %v1206 = vpop.f32.mrb[0].mxu0
      %v1207 = vpop.f32.mrb[0].mxu0
      %v1208 = vadd.f32 %v1065, %v1207
      %v1209 = vpop.f32.mrb[0].mxu0
      %1210 = vdwg.mxu0
      %v1211 = vpack.c.bf16 %v773, %v770
      %v1212 = vpack.c.bf16 %v781, %v778
      %v1213 = vpack.c.bf16 %v789, %v786
      %v1214 = vpack.c.bf16 %v797, %v794
      %v1215 = vpack.c.bf16 %v805, %v802
      %v1216 = vpack.c.bf16 %v813, %v810
      %v1217 = vpack.c.bf16 %v821, %v818
      %v1218 = vpack.c.bf16 %v829, %v826
      %v1219 = vld [vmem:[%s2 + $0xd8] sm:$0xf]
      %v1220 = vld [vmem:[%s2 + $0xdc] sm:$0xf]
      %v1221 = vld [vmem:[%s2 + $0xe0] sm:$0xf]
      %v1222 = vld [vmem:[%s2 + $0xe4] sm:$0xf]
      %v1223 = vld [vmem:[%s2 + $0xe8] sm:$0xf]
      %v1224 = vld [vmem:[%s2 + $0xec] sm:$0xf]
      %v1225 = vld [vmem:[%s2 + $0xf0] sm:$0xf]
      %v1226 = vld [vmem:[%s2 + $0xf4] sm:$0xf]
      %v1227 = vld [vmem:[%s2 + $0xf8] sm:$0xf]
      %v1228 = vld [vmem:[%s2 + $0xfc] sm:$0xf]
      %v1229 = vld [vmem:[%s2 + $0x100] sm:$0xf]
      %v1230 = vld [vmem:[%s2 + $0x104] sm:$0xf]
      %v1231 = vld [vmem:[%s2 + $0x108] sm:$0xf]
      %v1232 = vld [vmem:[%s2 + $0x10c] sm:$0xf]
      %v1233 = vld [vmem:[%s2 + $0x110] sm:$0xf]
      %v1234 = vld [vmem:[%s2 + $0x114] sm:$0xf]
      %v1235 = vpack.c.bf16 %v1152, %v1149
      %v1236 = vpack.c.bf16 %v1160, %v1157
      %v1237 = vpack.c.bf16 %v1168, %v1165
      %v1238 = vpack.c.bf16 %v1176, %v1173
      %v1239 = vpack.c.bf16 %v1184, %v1181
      %v1240 = vpack.c.bf16 %v1192, %v1189
      %v1241 = vpack.c.bf16 %v1200, %v1197
      %v1242 = vpack.c.bf16 %v1208, %v1205
      %v1243 = vld [vmem:[%s2 + $0x118] sm:$0xf]
      %v1244 = vld [vmem:[%s2 + $0x11c] sm:$0xf]
      %v1245 = vld [vmem:[%s2 + $0x120] sm:$0xf]
      %v1246 = vld [vmem:[%s2 + $0x124] sm:$0xf]
      %v1247 = vld [vmem:[%s2 + $0x128] sm:$0xf]
      %v1248 = vld [vmem:[%s2 + $0x12c] sm:$0xf]
      %v1249 = vld [vmem:[%s2 + $0x130] sm:$0xf]
      %v1250 = vld [vmem:[%s2 + $0x134] sm:$0xf]
      %v1251 = vld [vmem:[%s2 + $0x138] sm:$0xf]
      %v1252 = vld [vmem:[%s2 + $0x13c] sm:$0xf]
      %v1253 = vld [vmem:[%s2 + $0x140] sm:$0xf]
      %v1254 = vld [vmem:[%s2 + $0x144] sm:$0xf]
      %v1255 = vld [vmem:[%s2 + $0x148] sm:$0xf]
      %v1256 = vld [vmem:[%s2 + $0x14c] sm:$0xf]
      %v1257 = vld [vmem:[%s2 + $0x150] sm:$0xf]
      %v1258 = vld [vmem:[%s2 + $0x154] sm:$0xf]
      %v1275 = vunpack.c.l.b16 %v1243
      %v1276 = vunpack.c.l.b16 %v1244
      %v1277 = vunpack.c.l.b16 %v1245
      %v1278 = vunpack.c.l.b16 %v1246
      %v1279 = vunpack.c.l.b16 %v1247
      %v1280 = vunpack.c.l.b16 %v1248
      %v1281 = vunpack.c.l.b16 %v1249
      %v1282 = vunpack.c.l.b16 %v1250
      %v1283 = vunpack.c.l.b16 %v1251
      %v1284 = vunpack.c.l.b16 %v1252
      %v1285 = vunpack.c.l.b16 %v1253
      %v1286 = vunpack.c.l.b16 %v1254
      %v1287 = vunpack.c.l.b16 %v1255
      %v1288 = vunpack.c.l.b16 %v1256
      %v1289 = vunpack.c.l.b16 %v1257
      %v1290 = vunpack.c.l.b16 %v1258
      %v1291 = vpack.c.b16 %v1276, %v1275
      %v1292 = vpack.c.b16 %v1278, %v1277
      %v1293 = vpack.c.b16 %v1280, %v1279
      %v1294 = vpack.c.b16 %v1282, %v1281
      %v1295 = vpack.c.b16 %v1284, %v1283
      %v1296 = vpack.c.b16 %v1286, %v1285
      %v1297 = vpack.c.b16 %v1288, %v1287
      %v1298 = vpack.c.b16 %v1290, %v1289
      %1307 = vmatprep.subr.bf16.mxu0 0
      %1308 = vmatpush1.bf16.msra.mxu0 %v1291
      %1309 = vmatprep.subr.bf16.mxu0 0
      %1310 = vmatpush1.bf16.msra.mxu0 %v1292
      %1311 = vmatprep.subr.bf16.mxu0 0
      %1312 = vmatpush1.bf16.msra.mxu0 %v1293
      %1313 = vmatprep.subr.bf16.mxu0 0
      %1314 = vmatpush1.bf16.msra.mxu0 %v1294
      %1315 = vmatprep.subr.bf16.mxu0 0
      %1316 = vmatpush1.bf16.msra.mxu0 %v1295
      %1317 = vmatprep.subr.bf16.mxu0 0
      %1318 = vmatpush1.bf16.msra.mxu0 %v1296
      %1319 = vmatprep.subr.bf16.mxu0 0
      %1320 = vmatpush1.bf16.msra.mxu0 %v1297
      %1321 = vmatprep.subr.bf16.mxu0 0
      %1322 = vmatpush1.bf16.msra.mxu0 %v1298
      %1323 = vmatprep.subr.bf16.mxu0 0
      %1324 = vmatpush1.bf16.msra.mxu0 0
      %1325 = vmatprep.subr.bf16.mxu0 0
      %1326 = vmatpush1.bf16.msra.mxu0 0
      %1327 = vmatprep.subr.bf16.mxu0 0
      %1328 = vmatpush1.bf16.msra.mxu0 0
      %1329 = vmatprep.subr.bf16.mxu0 0
      %1330 = vmatpush1.bf16.msra.mxu0 0
      %1331 = vmatprep.subr.bf16.mxu0 0
      %1332 = vmatpush1.bf16.msra.mxu0 0
      %1333 = vmatprep.subr.bf16.mxu0 0
      %1334 = vmatpush1.bf16.msra.mxu0 0
      %1335 = vmatprep.subr.bf16.mxu0 0
      %1336 = vmatpush1.bf16.msra.mxu0 0
      %1337 = vmatprep.subr.bf16.mxu0 0
      %1338 = vmatpush1.bf16.msra.mxu0 0
      %1339 = vmatprep.mubr.bf16.mxu0 0
      %1340 = vmatmul.mubr.bf16.gmra.mrb[0].mxu0 %v1235
      %v1341 = vpop.f32.mrb[0].mxu0
      %v1342 = vadd.f32 0.0, %v1341
      %v1343 = vpop.f32.mrb[0].mxu0
      %v1344 = vpop.f32.mrb[0].mxu0
      %v1345 = vadd.f32 0.0, %v1344
      %v1346 = vpop.f32.mrb[0].mxu0
      %1347 = vmatprep.mubr.bf16.mxu0 0
      %1348 = vmatmul.mubr.bf16.gmra.mrb[0].mxu0 %v1236
      %v1349 = vpop.f32.mrb[0].mxu0
      %v1350 = vadd.f32 0.0, %v1349
      %v1351 = vpop.f32.mrb[0].mxu0
      %v1352 = vpop.f32.mrb[0].mxu0
      %v1353 = vadd.f32 0.0, %v1352
      %v1354 = vpop.f32.mrb[0].mxu0
      %1355 = vmatprep.mubr.bf16.mxu0 0
      %1356 = vmatmul.mubr.bf16.gmra.mrb[0].mxu0 %v1237
      %v1357 = vpop.f32.mrb[0].mxu0
      %v1358 = vadd.f32 0.0, %v1357
      %v1359 = vpop.f32.mrb[0].mxu0
      %v1360 = vpop.f32.mrb[0].mxu0
      %v1361 = vadd.f32 0.0, %v1360
      %v1362 = vpop.f32.mrb[0].mxu0
      %1363 = vmatprep.mubr.bf16.mxu0 0
      %1364 = vmatmul.mubr.bf16.gmra.mrb[0].mxu0 %v1238
      %v1365 = vpop.f32.mrb[0].mxu0
      %v1366 = vadd.f32 0.0, %v1365
      %v1367 = vpop.f32.mrb[0].mxu0
      %v1368 = vpop.f32.mrb[0].mxu0
      %v1369 = vadd.f32 0.0, %v1368
      %v1370 = vpop.f32.mrb[0].mxu0
      %1371 = vmatprep.mubr.bf16.mxu0 0
      %1372 = vmatmul.mubr.bf16.gmra.mrb[0].mxu0 %v1239
      %v1373 = vpop.f32.mrb[0].mxu0
      %v1374 = vadd.f32 0.0, %v1373
      %v1375 = vpop.f32.mrb[0].mxu0
      %v1376 = vpop.f32.mrb[0].mxu0
      %v1377 = vadd.f32 0.0, %v1376
      %v1378 = vpop.f32.mrb[0].mxu0
      %1379 = vmatprep.mubr.bf16.mxu0 0
      %1380 = vmatmul.mubr.bf16.gmra.mrb[0].mxu0 %v1240
      %v1381 = vpop.f32.mrb[0].mxu0
      %v1382 = vadd.f32 0.0, %v1381
      %v1383 = vpop.f32.mrb[0].mxu0
      %v1384 = vpop.f32.mrb[0].mxu0
      %v1385 = vadd.f32 0.0, %v1384
      %v1386 = vpop.f32.mrb[0].mxu0
      %1387 = vmatprep.mubr.bf16.mxu0 0
      %1388 = vmatmul.mubr.bf16.gmra.mrb[0].mxu0 %v1241
      %v1389 = vpop.f32.mrb[0].mxu0
      %v1390 = vadd.f32 0.0, %v1389
      %v1391 = vpop.f32.mrb[0].mxu0
      %v1392 = vpop.f32.mrb[0].mxu0
      %v1393 = vadd.f32 0.0, %v1392
      %v1394 = vpop.f32.mrb[0].mxu0
      %1395 = vmatprep.mubr.bf16.mxu0 0
      %1396 = vmatmul.mubr.bf16.gmra.mrb[0].mxu0 %v1242
      %v1397 = vpop.f32.mrb[0].mxu0
      %v1398 = vadd.f32 0.0, %v1397
      %v1399 = vpop.f32.mrb[0].mxu0
      %v1400 = vpop.f32.mrb[0].mxu0
      %v1401 = vadd.f32 0.0, %v1400
      %v1402 = vpop.f32.mrb[0].mxu0
      %1403 = vdwg.mxu0
      %v1420 = vunpack.c.l.b16 %v1219
      %v1421 = vunpack.c.l.b16 %v1220
      %v1422 = vunpack.c.l.b16 %v1221
      %v1423 = vunpack.c.l.b16 %v1222
      %v1424 = vunpack.c.l.b16 %v1223
      %v1425 = vunpack.c.l.b16 %v1224
      %v1426 = vunpack.c.l.b16 %v1225
      %v1427 = vunpack.c.l.b16 %v1226
      %v1428 = vunpack.c.l.b16 %v1227
      %v1429 = vunpack.c.l.b16 %v1228
      %v1430 = vunpack.c.l.b16 %v1229
      %v1431 = vunpack.c.l.b16 %v1230
      %v1432 = vunpack.c.l.b16 %v1231
      %v1433 = vunpack.c.l.b16 %v1232
      %v1434 = vunpack.c.l.b16 %v1233
      %v1435 = vunpack.c.l.b16 %v1234
      %v1436 = vpack.c.b16 %v1421, %v1420
      %v1437 = vpack.c.b16 %v1423, %v1422
      %v1438 = vpack.c.b16 %v1425, %v1424
      %v1439 = vpack.c.b16 %v1427, %v1426
      %v1440 = vpack.c.b16 %v1429, %v1428
      %v1441 = vpack.c.b16 %v1431, %v1430
      %v1442 = vpack.c.b16 %v1433, %v1432
      %v1443 = vpack.c.b16 %v1435, %v1434
      %1452 = vmatprep.subr.bf16.mxu0 0
      %1453 = vmatpush1.bf16.msra.mxu0 %v1436
      %1454 = vmatprep.subr.bf16.mxu0 0
      %1455 = vmatpush1.bf16.msra.mxu0 %v1437
      %1456 = vmatprep.subr.bf16.mxu0 0
      %1457 = vmatpush1.bf16.msra.mxu0 %v1438
      %1458 = vmatprep.subr.bf16.mxu0 0
      %1459 = vmatpush1.bf16.msra.mxu0 %v1439
      %1460 = vmatprep.subr.bf16.mxu0 0
      %1461 = vmatpush1.bf16.msra.mxu0 %v1440
      %1462 = vmatprep.subr.bf16.mxu0 0
      %1463 = vmatpush1.bf16.msra.mxu0 %v1441
      %1464 = vmatprep.subr.bf16.mxu0 0
      %1465 = vmatpush1.bf16.msra.mxu0 %v1442
      %1466 = vmatprep.subr.bf16.mxu0 0
      %1467 = vmatpush1.bf16.msra.mxu0 %v1443
      %1468 = vmatprep.subr.bf16.mxu0 0
      %1469 = vmatpush1.bf16.msra.mxu0 0
      %1470 = vmatprep.subr.bf16.mxu0 0
      %1471 = vmatpush1.bf16.msra.mxu0 0
      %1472 = vmatprep.subr.bf16.mxu0 0
      %1473 = vmatpush1.bf16.msra.mxu0 0
      %1474 = vmatprep.subr.bf16.mxu0 0
      %1475 = vmatpush1.bf16.msra.mxu0 0
      %1476 = vmatprep.subr.bf16.mxu0 0
      %1477 = vmatpush1.bf16.msra.mxu0 0
      %1478 = vmatprep.subr.bf16.mxu0 0
      %1479 = vmatpush1.bf16.msra.mxu0 0
      %1480 = vmatprep.subr.bf16.mxu0 0
      %1481 = vmatpush1.bf16.msra.mxu0 0
      %1482 = vmatprep.subr.bf16.mxu0 0
      %1483 = vmatpush1.bf16.msra.mxu0 0
      %1484 = vmatprep.mubr.bf16.mxu0 0
      %1485 = vmatmul.mubr.bf16.gmra.mrb[0].mxu0 %v1211
      %v1486 = vpop.f32.mrb[0].mxu0
      %v1487 = vadd.f32 %v1342, %v1486
      %v1488 = vpop.f32.mrb[0].mxu0
      %v1489 = vpop.f32.mrb[0].mxu0
      %v1490 = vadd.f32 %v1345, %v1489
      %v1491 = vpop.f32.mrb[0].mxu0
      %1492 = vmatprep.mubr.bf16.mxu0 0
      %1493 = vmatmul.mubr.bf16.gmra.mrb[0].mxu0 %v1212
      %v1494 = vpop.f32.mrb[0].mxu0
      %v1495 = vadd.f32 %v1350, %v1494
      %v1496 = vpop.f32.mrb[0].mxu0
      %v1497 = vpop.f32.mrb[0].mxu0
      %v1498 = vadd.f32 %v1353, %v1497
      %v1499 = vpop.f32.mrb[0].mxu0
      %1500 = vmatprep.mubr.bf16.mxu0 0
      %1501 = vmatmul.mubr.bf16.gmra.mrb[0].mxu0 %v1213
      %v1502 = vpop.f32.mrb[0].mxu0
      %v1503 = vadd.f32 %v1358, %v1502
      %v1504 = vpop.f32.mrb[0].mxu0
      %v1505 = vpop.f32.mrb[0].mxu0
      %v1506 = vadd.f32 %v1361, %v1505
      %v1507 = vpop.f32.mrb[0].mxu0
      %1508 = vmatprep.mubr.bf16.mxu0 0
      %1509 = vmatmul.mubr.bf16.gmra.mrb[0].mxu0 %v1214
      %v1510 = vpop.f32.mrb[0].mxu0
      %v1511 = vadd.f32 %v1366, %v1510
      %v1512 = vpop.f32.mrb[0].mxu0
      %v1513 = vpop.f32.mrb[0].mxu0
      %v1514 = vadd.f32 %v1369, %v1513
      %v1515 = vpop.f32.mrb[0].mxu0
      %1516 = vmatprep.mubr.bf16.mxu0 0
      %1517 = vmatmul.mubr.bf16.gmra.mrb[0].mxu0 %v1215
      %v1518 = vpop.f32.mrb[0].mxu0
      %v1519 = vadd.f32 %v1374, %v1518
      %v1520 = vpop.f32.mrb[0].mxu0
      %v1521 = vpop.f32.mrb[0].mxu0
      %v1522 = vadd.f32 %v1377, %v1521
      %v1523 = vpop.f32.mrb[0].mxu0
      %1524 = vmatprep.mubr.bf16.mxu0 0
      %1525 = vmatmul.mubr.bf16.gmra.mrb[0].mxu0 %v1216
      %v1526 = vpop.f32.mrb[0].mxu0
      %v1527 = vadd.f32 %v1382, %v1526
      %v1528 = vpop.f32.mrb[0].mxu0
      %v1529 = vpop.f32.mrb[0].mxu0
      %v1530 = vadd.f32 %v1385, %v1529
      %v1531 = vpop.f32.mrb[0].mxu0
      %1532 = vmatprep.mubr.bf16.mxu0 0
      %1533 = vmatmul.mubr.bf16.gmra.mrb[0].mxu0 %v1217
      %v1534 = vpop.f32.mrb[0].mxu0
      %v1535 = vadd.f32 %v1390, %v1534
      %v1536 = vpop.f32.mrb[0].mxu0
      %v1537 = vpop.f32.mrb[0].mxu0
      %v1538 = vadd.f32 %v1393, %v1537
      %v1539 = vpop.f32.mrb[0].mxu0
      %1540 = vmatprep.mubr.bf16.mxu0 0
      %1541 = vmatmul.mubr.bf16.gmra.mrb[0].mxu0 %v1218
      %v1542 = vpop.f32.mrb[0].mxu0
      %v1543 = vadd.f32 %v1398, %v1542
      %v1544 = vpop.f32.mrb[0].mxu0
      %v1545 = vpop.f32.mrb[0].mxu0
      %v1546 = vadd.f32 %v1401, %v1545
      %v1547 = vpop.f32.mrb[0].mxu0
      %1548 = vdwg.mxu0
      %v1549 = vld [vmem:[%s4] sm:$0x1]
      %v1551 = vlaneseq
      %v1552 = vshrl.u32 %v1551, 7
      %v1553 = vsub.s32 0, %v1552
      %v1554 = vrot.slane %v1549, %v1553
      %v1556 = vadd.f32 %v1487, %v1554
      %v1557 = vadd.f32 %v1490, %v1554
      %v1558 = vadd.f32 %v1495, %v1554
      %v1559 = vadd.f32 %v1498, %v1554
      %v1560 = vadd.f32 %v1503, %v1554
      %v1561 = vadd.f32 %v1506, %v1554
      %v1562 = vadd.f32 %v1511, %v1554
      %v1563 = vadd.f32 %v1514, %v1554
      %v1564 = vadd.f32 %v1519, %v1554
      %v1565 = vadd.f32 %v1522, %v1554
      %v1566 = vadd.f32 %v1527, %v1554
      %v1567 = vadd.f32 %v1530, %v1554
      %v1568 = vadd.f32 %v1535, %v1554
      %v1569 = vadd.f32 %v1538, %v1554
      %v1570 = vadd.f32 %v1543, %v1554
      %v1571 = vadd.f32 %v1546, %v1554
      %1572 = vst [vmem:[%s248] sm:$0xff] %v1556
      %1573 = vst [vmem:[%s248 + $0x8] sm:$0xff] %v1557
      %1574 = vst [vmem:[%s248 + $0x10] sm:$0xff] %v1558
      %1575 = vst [vmem:[%s248 + $0x18] sm:$0xff] %v1559
      %1576 = vst [vmem:[%s248 + $0x20] sm:$0xff] %v1560
      %1577 = vst [vmem:[%s248 + $0x28] sm:$0xff] %v1561
      %1578 = vst [vmem:[%s248 + $0x30] sm:$0xff] %v1562
      %1579 = vst [vmem:[%s248 + $0x38] sm:$0xff] %v1563
      %1580 = vst [vmem:[%s248 + $0x40] sm:$0xff] %v1564
      %1581 = vst [vmem:[%s248 + $0x48] sm:$0xff] %v1565
      %1582 = vst [vmem:[%s248 + $0x50] sm:$0xff] %v1566
      %1583 = vst [vmem:[%s248 + $0x58] sm:$0xff] %v1567
      %1584 = vst [vmem:[%s248 + $0x60] sm:$0xff] %v1568
      %1585 = vst [vmem:[%s248 + $0x68] sm:$0xff] %v1569
      %1586 = vst [vmem:[%s248 + $0x70] sm:$0xff] %v1570
      %1587 = vst [vmem:[%s248 + $0x78] sm:$0xff] %v1571
      %s1588 = smul.u32 16, %s16
      %p1589 = scmp.lt.s32.totalorder %s1588, 31
      %s1590 = scalar_select %p1589, %s1588, 31
      %s1591 = smul.addr %s1590, 8
      %s1592 = scalar_lea.vmem %s5, %s1591
      // Predicated region
      $region41: #{forward.1} parent=39 // pred_check
        %p1593 = pneg %p149
      $region42: #{forward.1} parent=39 // pred_check_branch
        %1595 = sbr.rel (%p1593) target = $region44
      $region43: #{forward.1} parent=39 // pred_region
        %s1596 = smul.u32 16, %s16
      $region44: #{forward.1} parent=39 // pred_fallthru
        _
    $region40: #{forward.1} parent=5 // pred_fallthru
      _
    %p1597 = scmp.le.s32.totalorder 2, %s11
    // Predicated region
    $region45: #{forward.1} parent=5 // pred_check
      %p1598 = pneg %p1597
    $region46: #{forward.1} parent=5 // pred_check_branch
      %1600 = sbr.rel (%p1598) target = $region48
    $region47: #{forward.1} parent=5 // pred_region
      %s1601 = ssub.s32 %s11, 2
      // Predicated region
      $region49: #{forward.1} parent=47 // pred_check
        %p1602 = pneg %p155
      $region50: #{forward.1} parent=47 // pred_check_branch
        %1604 = sbr.rel (%p1602) target = $region52
      $region51: #{forward.1} parent=47 // pred_region
        %s1605 = smul.u32 16, %s17
        %p1606 = scmp.lt.s32.totalorder %s1605, 31
        %s1607 = scalar_select %p1606, %s1605, 31
        %s1608 = smul.addr %s1607, 8
        %s1609 = scalar_lea.vmem %s5, %s1608
      $region52: #{forward.1} parent=47 // pred_fallthru
        _
    $region48: #{forward.1} parent=5 // pred_fallthru
      _
  $region6: #{forward.1} parent=0 // loop_footer
    %s15 = sadd.s32 1, %s11
  $region7: #{forward.1} parent=0 // loop_footer_branch
    %10 = sbr.rel target = $region3
  $region8: #{forward.1} parent=0 // loop_exit
    _

</llo_original>
